<compile_context>
chip_gen: v7x
topology: tpu7x:2x2x1
jax: 0.10.0
libtpu: 0.0.40
codegen_flags: <defaults>
</compile_context>

<pallas_src>
import functools

import jax
import jax.numpy as jnp
from jax import lax
from jax.experimental import pallas as pl
from jax.experimental.pallas import tpu as pltpu


def _attn_kernel(*refs, heads, dim_head, fuse_qkv):
    """One (batch, query-tile) grid step.

    Non-fused refs: x(1,C,N), xq(1,C,TQ), wqkv(3h,C), woutT(h,C), bias(C,1),
                    o(1,C,TQ), kv_scratch(2h,N).
    Fused    refs: x(1,C,N), wqkv(3h,C), woutT(h,C), bias(C,1), o(1,C,N).
    """
    if fuse_qkv:
        x_ref, wqkv_ref, woutT_ref, bias_ref, o_ref = refs
    else:
        x_ref, xq_ref, wqkv_ref, woutT_ref, bias_ref, o_ref, kv_ref = refs

    hidden = heads * dim_head
    x = x_ref[0]                                   # (C, N) bf16

    if fuse_qkv:
        # nq == 1: single fused QKV projection (q rows pre-scaled in wrapper).
        qkvT = lax.dot_general(wqkv_ref[...], x, (((1,), (0,)), ((), ())),
                               preferred_element_type=jnp.float32)   # (3h, N)
        qTb = qkvT[:hidden].astype(jnp.bfloat16)                     # (h, N)
        kT = qkvT[hidden:2 * hidden].astype(jnp.bfloat16)            # (h, N)
        vT = qkvT[2 * hidden:].astype(jnp.bfloat16)                  # (h, N)
        get_k = lambda lo: kT[lo:lo + dim_head]
        get_v = lambda lo: vT[lo:lo + dim_head]
    else:
        qi = pl.program_id(1)

        # K/V projection once per batch; cached in VMEM scratch across query
        # tiles (q grid axis is "arbitrary", scratch persists across steps).
        @pl.when(qi == 0)
        def _():
            kvT = lax.dot_general(wqkv_ref[hidden:, :], x,
                                  (((1,), (0,)), ((), ())),
                                  preferred_element_type=jnp.float32)  # (2h, N)
            kv_ref[...] = kvT.astype(jnp.bfloat16)

        # Query projection for this tile's columns only.
        qT = lax.dot_general(wqkv_ref[:hidden, :], xq_ref[0],
                             (((1,), (0,)), ((), ())),
                             preferred_element_type=jnp.float32)       # (h, TQ)
        qTb = qT.astype(jnp.bfloat16)
        get_k = lambda lo: kv_ref[lo:lo + dim_head, :]
        get_v = lambda lo: kv_ref[hidden + lo:hidden + lo + dim_head, :]

    # Per-head attention with deferred softmax normalization.  Each head's
    # normalized (dh, TQ) output is collected so the output projection is one
    # (C, hidden) @ (hidden, TQ) matmul.
    head_parts = []
    for hh in range(heads):                        # heads is small (static)
        lo = hh * dim_head
        qh = qTb[lo:lo + dim_head]                 # (dh, TQ) bf16
        kh = get_k(lo)                             # (dh, N)  bf16
        vh = get_v(lo)                             # (dh, N)  bf16

        # simT[j, i] = sum_d k[d, j] * q[d, i] == sim[i, j]; keys on sublanes,
        # queries on lanes -> max/sum reduce to (1, TQ) row vectors.
        simT = lax.dot_general(kh, qh, (((0,), (0,)), ((), ())),
                               preferred_element_type=jnp.float32)     # (N, TQ)
        m = jnp.max(simT, axis=0, keepdims=True)                       # (1, TQ)
        p = jnp.exp(simT - m)                                          # f32 (v5e-safe)
        l = jnp.sum(p, axis=0, keepdims=True)                          # (1, TQ)

        ohT = lax.dot_general(vh, p.astype(jnp.bfloat16),
                              (((1,), (0,)), ((), ())),
                              preferred_element_type=jnp.float32)      # (dh, TQ)
        head_parts.append(
            (ohT * pl.reciprocal(l, approx=True)).astype(jnp.bfloat16))

    pv = jnp.concatenate(head_parts, axis=0)                           # (hidden, TQ)

    # Fused output projection across all heads + bias.
    y = lax.dot_general(woutT_ref[...], pv, (((0,), (0,)), ((), ())),
                        preferred_element_type=jnp.float32)            # (C, TQ)
    o_ref[0] = (y + bias_ref[...]).astype(o_ref.dtype)


def attn_block(x_nchw, w_qkv, w_out, b_out, *, heads, dim_head, q_tile=256):
    """x_nchw: (B, C, H, W). w_qkv: (3*hidden, C, 1, 1). w_out: (C, hidden, 1, 1)."""
    B, C, H, W = x_nchw.shape
    hidden = heads * dim_head
    N = H * W
    scale = dim_head ** (-0.5)

    # Largest lane-dense query tile (multiple of 128) dividing N, capped at q_tile.
    if N % 128 == 0:
        tq = max(min((q_tile // 128) * 128, N), 128)
        while N % tq != 0:
            tq -= 128
    else:
        tq = N
    nq = N // tq
    fuse_qkv = (nq == 1)

    # NCHW flattened over (H, W) is already (B, C, N): plain reshape, no transpose.
    x = x_nchw.reshape(B, C, N).astype(jnp.bfloat16)
    wqkv_f32 = w_qkv.reshape(3 * hidden, C).astype(jnp.float32)
    # Fold the 1/sqrt(dim_head) scale into the q weight rows in the wrapper.
    wqkv2d = jnp.concatenate(
        [wqkv_f32[:hidden] * scale, wqkv_f32[hidden:]], axis=0).astype(jnp.bfloat16)
    woutT2d = w_out.reshape(C, hidden).T.astype(jnp.bfloat16)          # (hidden, C)
    bias2d = b_out.reshape(C, 1).astype(jnp.float32)

    kernel = functools.partial(
        _attn_kernel, heads=heads, dim_head=dim_head, fuse_qkv=fuse_qkv)

    if fuse_qkv:
        in_specs = [
            pl.BlockSpec((1, C, N), lambda b, q: (b, 0, 0)),
            pl.BlockSpec((3 * hidden, C), lambda b, q: (0, 0)),
            pl.BlockSpec((hidden, C), lambda b, q: (0, 0)),
            pl.BlockSpec((C, 1), lambda b, q: (0, 0)),
        ]
        scratch_shapes = []
        args = (x, wqkv2d, woutT2d, bias2d)
        dim_sem = ("parallel", "parallel")
    else:
        in_specs = [
            pl.BlockSpec((1, C, N), lambda b, q: (b, 0, 0)),    # full x (K/V)
            pl.BlockSpec((1, C, tq), lambda b, q: (b, 0, q)),   # query columns
            pl.BlockSpec((3 * hidden, C), lambda b, q: (0, 0)),
            pl.BlockSpec((hidden, C), lambda b, q: (0, 0)),
            pl.BlockSpec((C, 1), lambda b, q: (0, 0)),
        ]
        scratch_shapes = [pltpu.VMEM((2 * hidden, N), jnp.bfloat16)]   # K/V cache
        args = (x, x, wqkv2d, woutT2d, bias2d)
        # q-axis must be "arbitrary": the K/V cache carries state across q tiles.
        dim_sem = ("parallel", "arbitrary")

    itemsize_out = jnp.dtype(x_nchw.dtype).itemsize
    vmem_est = (
        2 * C * N * 2
        + (0 if fuse_qkv else 2 * C * tq * 2)
        + 2 * C * tq * itemsize_out
        + 2 * (4 * hidden * C) * 2 + 2 * C * 4
        + (0 if fuse_qkv else 2 * hidden * N * 2)
        + 2 * N * tq * 4
        + 3 * hidden * N * 4
    )
    vmem_limit = int(min(max(2 * vmem_est, 32 * 1024 * 1024), 64 * 1024 * 1024))

    cost = pl.CostEstimate(
        flops=int(2 * B * (3 * hidden * C * N + 2 * hidden * N * N + C * hidden * N)),
        transcendentals=int(B * heads * N * N),
        bytes_accessed=int(B * C * N * (2 + itemsize_out) + 4 * hidden * C * 2 + C * 4),
    )

    out = pl.pallas_call(
        kernel,
        out_shape=jax.ShapeDtypeStruct((B, C, N), x_nchw.dtype),
        grid_spec=pltpu.PrefetchScalarGridSpec(
            num_scalar_prefetch=0,
            grid=(B, nq),
            in_specs=in_specs,
            out_specs=pl.BlockSpec((1, C, tq), lambda b, q: (b, 0, q)),
            scratch_shapes=scratch_shapes,
        ),
        compiler_params=pltpu.CompilerParams(
            dimension_semantics=dim_sem,
            vmem_limit_bytes=vmem_limit),
        cost_estimate=cost,
    )(*args)

    return out.reshape(B, C, H, W)


def attn_block_reference(x_nchw, w_qkv, w_out, b_out, *, heads, dim_head):
    """Pure-JAX f32 reference mirroring the PyTorch forward pass exactly."""
    B, C, H, W = x_nchw.shape
    hidden = heads * dim_head
    N = H * W
    scale = dim_head ** (-0.5)

    qkv = jnp.einsum('bchw,oc->bohw', x_nchw, w_qkv.reshape(3 * hidden, C))
    q, k, v = jnp.split(qkv, 3, axis=1)                         # (B, hidden, H, W)

    def rearr(t):  # 'b (h c) x y -> b h c (x y)'
        return t.reshape(B, heads, dim_head, N)

    q, k, v = rearr(q) * scale, rearr(k), rearr(v)
    sim = jnp.einsum('bhdi,bhdj->bhij', q, k)
    sim = sim - jnp.max(sim, axis=-1, keepdims=True)
    attn = jax.nn.softmax(sim, axis=-1)
    out = jnp.einsum('bhij,bhdj->bhid', attn, v)                # (B, heads, N, dh)
    out = jnp.transpose(out, (0, 1, 3, 2)).reshape(B, hidden, H, W)
    y = jnp.einsum('bkhw,ck->bchw', out, w_out.reshape(C, hidden))
    return y + b_out.reshape(1, C, 1, 1)


if __name__ == "__main__":
    # Small, deterministic configuration consistent with the module defaults.
    B, dim, H, W = 2, 4, 16, 16
    heads, dim_head = 4, 32
    hidden = heads * dim_head

    key = jax.random.PRNGKey(0)
    kx, kq, kw, kb = jax.random.split(key, 4)

    x = jax.random.normal(kx, (B, dim, H, W), dtype=jnp.float32)
    w_qkv = jax.random.normal(kq, (hidden * 3, dim, 1, 1), dtype=jnp.float32) * 0.2
    w_out = jax.random.normal(kw, (dim, hidden, 1, 1), dtype=jnp.float32) * 0.1
    b_out = jax.random.normal(kb, (dim,), dtype=jnp.float32) * 0.05

    y_ref = attn_block_reference(
        x, w_qkv, w_out, b_out, heads=heads, dim_head=dim_head)

    # Multi-tile path (nq > 1): exercises the q-tiled grid + per-batch K/V cache.
    y_tiled = attn_block(x, w_qkv, w_out, b_out,
                         heads=heads, dim_head=dim_head, q_tile=128)
    y_tiled = jax.block_until_ready(y_tiled)
    assert y_tiled.shape == (B, dim, H, W)
    # bf16 MXU inputs with f32 accumulation -> relax tolerance vs f32 reference.
    assert jnp.allclose(y_tiled, y_ref, atol=2e-2, rtol=2e-2), "tiled mismatch"

    # Single-tile path (nq == 1): exercises the fused QKV projection.
    y_full = attn_block(x, w_qkv, w_out, b_out,
                        heads=heads, dim_head=dim_head, q_tile=256)
    y_full = jax.block_until_ready(y_full)
    assert jnp.allclose(y_full, y_ref, atol=2e-2, rtol=2e-2), "full-tile mismatch"

    print("KERNEL_OK")
</pallas_src>

<mosaic_0001>
module attributes {stable_mosaic.version = 11 : i64} {
  func.func @_attn_kernel(%arg0: i32, %arg1: i32, %arg2: memref<1x4x256xbf16, #tpu.memory_space<vmem>>, %arg3: memref<1x4x128xbf16, #tpu.memory_space<vmem>>, %arg4: memref<384x4xbf16, #tpu.memory_space<vmem>>, %arg5: memref<128x4xbf16, #tpu.memory_space<vmem>>, %arg6: memref<4x1xf32, #tpu.memory_space<vmem>>, %arg7: memref<1x4x128xf32, #tpu.memory_space<vmem>>, %arg8: memref<256x256xbf16, #tpu.memory_space<vmem>>) attributes {dimension_semantics = [#tpu.dimension_semantics<parallel>, #tpu.dimension_semantics<arbitrary>], iteration_bounds = array<i64: 2, 2>, scalar_prefetch = 0 : i64, scratch_operands = 1 : i64, tpu.core_type = #tpu.core_type<tc>, window_params = [{transform_indices = @transform_0, window_bounds = array<i64: 1, 4, 256>}, {transform_indices = @transform_1, window_bounds = array<i64: 1, 4, 128>}, {pipeline_mode = #tpu.pipeline_mode<synchronous>, transform_indices = @transform_2, window_bounds = array<i64: 384, 4>}, {pipeline_mode = #tpu.pipeline_mode<synchronous>, transform_indices = @transform_3, window_bounds = array<i64: 128, 4>}, {pipeline_mode = #tpu.pipeline_mode<synchronous>, transform_indices = @transform_4, window_bounds = array<i64: 4, 1>}, {transform_indices = @transform_5, window_bounds = array<i64: 1, 4, 128>}]} {
    %c0 = arith.constant 0 : index
    %c0_0 = arith.constant 0 : index
    %c0_1 = arith.constant 0 : index
    %0 = vector.load %arg2[%c0, %c0_0, %c0_1] : memref<1x4x256xbf16, #tpu.memory_space<vmem>>, vector<1x4x256xbf16>
    %1 = vector.shape_cast %0 : vector<1x4x256xbf16> to vector<4x256xbf16>
    %c0_i32 = arith.constant 0 : i32
    %2 = arith.cmpi eq, %arg1, %c0_i32 : i32
    %3 = arith.extui %2 : i1 to i32
    %c0_i32_2 = arith.constant 0 : i32
    %4 = arith.cmpi ne, %3, %c0_i32_2 : i32
    scf.if %4 {
      %c128_41 = arith.constant 128 : index
      %c0_42 = arith.constant 0 : index
      %87 = vector.load %arg4[%c128_41, %c0_42] : memref<384x4xbf16, #tpu.memory_space<vmem>>, vector<256x4xbf16>
      %cst_43 = arith.constant dense<0.000000e+00> : vector<256x256xf32>
      %88 = tpu.matmul %87, %1, %cst_43 {dimension_numbers = #tpu.dot_dimension_numbers<[1], [0], [0], [1], [0, 0, 1, 1], [], []>} : vector<256x4xbf16>, vector<4x256xbf16>, vector<256x256xf32> -> vector<256x256xf32>
      %89 = arith.truncf %88 : vector<256x256xf32> to vector<256x256xbf16>
      %c0_44 = arith.constant 0 : index
      %c0_45 = arith.constant 0 : index
      %90 = vector.load %arg8[%c0_44, %c0_45] : memref<256x256xbf16, #tpu.memory_space<vmem>>, vector<256x256xbf16>
      tpu.vector_store %arg8[%c0_44, %c0_45], %89 {strides = array<i32>} : memref<256x256xbf16, #tpu.memory_space<vmem>>, vector<256x256xbf16>,
    } else {
    }
    %c0_3 = arith.constant 0 : index
    %c0_4 = arith.constant 0 : index
    %5 = vector.load %arg4[%c0_3, %c0_4] : memref<384x4xbf16, #tpu.memory_space<vmem>>, vector<128x4xbf16>
    %c0_5 = arith.constant 0 : index
    %c0_6 = arith.constant 0 : index
    %c0_7 = arith.constant 0 : index
    %6 = vector.load %arg3[%c0_5, %c0_6, %c0_7] : memref<1x4x128xbf16, #tpu.memory_space<vmem>>, vector<1x4x128xbf16>
    %7 = vector.shape_cast %6 : vector<1x4x128xbf16> to vector<4x128xbf16>
    %cst = arith.constant dense<0.000000e+00> : vector<128x128xf32>
    %8 = tpu.matmul %5, %7, %cst {dimension_numbers = #tpu.dot_dimension_numbers<[1], [0], [0], [1], [0, 0, 1, 1], [], []>} : vector<128x4xbf16>, vector<4x128xbf16>, vector<128x128xf32> -> vector<128x128xf32>
    %9 = arith.truncf %8 : vector<128x128xf32> to vector<128x128xbf16>
    %10 = vector.extract_strided_slice %9 {offsets = [0, 0], sizes = [32, 128], strides = [1, 1]} : vector<128x128xbf16> to vector<32x128xbf16>
    %c0_8 = arith.constant 0 : index
    %c0_9 = arith.constant 0 : index
    %11 = vector.load %arg8[%c0_8, %c0_9] : memref<256x256xbf16, #tpu.memory_space<vmem>>, vector<32x256xbf16>
    %c128 = arith.constant 128 : index
    %c0_10 = arith.constant 0 : index
    %12 = vector.load %arg8[%c128, %c0_10] : memref<256x256xbf16, #tpu.memory_space<vmem>>, vector<32x256xbf16>
    %cst_11 = arith.constant dense<0.000000e+00> : vector<256x128xf32>
    %13 = tpu.matmul %11, %10, %cst_11 {dimension_numbers = #tpu.dot_dimension_numbers<[0], [0], [1], [1], [0, 1, 1, 1], [], []>} : vector<32x256xbf16>, vector<32x128xbf16>, vector<256x128xf32> -> vector<256x128xf32>
    %cst_12 = arith.constant dense<0xFF800000> : vector<128xf32>
    %14 = vector.multi_reduction <maximumf>, %13, %cst_12 [0] : vector<256x128xf32> to vector<128xf32>
    %15 = vector.shape_cast %14 : vector<128xf32> to vector<1x128xf32>
    %16 = vector.broadcast %15 : vector<1x128xf32> to vector<256x128xf32>
    %17 = arith.subf %13, %16 : vector<256x128xf32>
    %18 = math.exp %17 : vector<256x128xf32>
    %cst_13 = arith.constant dense<0.000000e+00> : vector<128xf32>
    %19 = vector.multi_reduction <add>, %18, %cst_13 [0] : vector<256x128xf32> to vector<128xf32>
    %20 = vector.shape_cast %19 : vector<128xf32> to vector<1x128xf32>
    %21 = arith.truncf %18 : vector<256x128xf32> to vector<256x128xbf16>
    %cst_14 = arith.constant dense<0.000000e+00> : vector<32x128xf32>
    %22 = tpu.matmul %12, %21, %cst_14 {dimension_numbers = #tpu.dot_dimension_numbers<[1], [0], [0], [1], [0, 0, 1, 1], [], []>} : vector<32x256xbf16>, vector<256x128xbf16>, vector<32x128xf32> -> vector<32x128xf32>
    %23 = tpu.reciprocal %20 {approx = true} : vector<1x128xf32> -> vector<1x128xf32>
    %24 = vector.broadcast %23 : vector<1x128xf32> to vector<32x128xf32>
    %25 = arith.mulf %22, %24 : vector<32x128xf32>
    %26 = arith.truncf %25 : vector<32x128xf32> to vector<32x128xbf16>
    %27 = vector.extract_strided_slice %9 {offsets = [32, 0], sizes = [32, 128], strides = [1, 1]} : vector<128x128xbf16> to vector<32x128xbf16>
    %c32 = arith.constant 32 : index
    %c0_15 = arith.constant 0 : index
    %28 = vector.load %arg8[%c32, %c0_15] : memref<256x256xbf16, #tpu.memory_space<vmem>>, vector<32x256xbf16>
    %c160 = arith.constant 160 : index
    %c0_16 = arith.constant 0 : index
    %29 = vector.load %arg8[%c160, %c0_16] : memref<256x256xbf16, #tpu.memory_space<vmem>>, vector<32x256xbf16>
    %cst_17 = arith.constant dense<0.000000e+00> : vector<256x128xf32>
    %30 = tpu.matmul %28, %27, %cst_17 {dimension_numbers = #tpu.dot_dimension_numbers<[0], [0], [1], [1], [0, 1, 1, 1], [], []>} : vector<32x256xbf16>, vector<32x128xbf16>, vector<256x128xf32> -> vector<256x128xf32>
    %cst_18 = arith.constant dense<0xFF800000> : vector<128xf32>
    %31 = vector.multi_reduction <maximumf>, %30, %cst_18 [0] : vector<256x128xf32> to vector<128xf32>
    %32 = vector.shape_cast %31 : vector<128xf32> to vector<1x128xf32>
    %33 = vector.broadcast %32 : vector<1x128xf32> to vector<256x128xf32>
    %34 = arith.subf %30, %33 : vector<256x128xf32>
    %35 = math.exp %34 : vector<256x128xf32>
    %cst_19 = arith.constant dense<0.000000e+00> : vector<128xf32>
    %36 = vector.multi_reduction <add>, %35, %cst_19 [0] : vector<256x128xf32> to vector<128xf32>
    %37 = vector.shape_cast %36 : vector<128xf32> to vector<1x128xf32>
    %38 = arith.truncf %35 : vector<256x128xf32> to vector<256x128xbf16>
    %cst_20 = arith.constant dense<0.000000e+00> : vector<32x128xf32>
    %39 = tpu.matmul %29, %38, %cst_20 {dimension_numbers = #tpu.dot_dimension_numbers<[1], [0], [0], [1], [0, 0, 1, 1], [], []>} : vector<32x256xbf16>, vector<256x128xbf16>, vector<32x128xf32> -> vector<32x128xf32>
    %40 = tpu.reciprocal %37 {approx = true} : vector<1x128xf32> -> vector<1x128xf32>
    %41 = vector.broadcast %40 : vector<1x128xf32> to vector<32x128xf32>
    %42 = arith.mulf %39, %41 : vector<32x128xf32>
    %43 = arith.truncf %42 : vector<32x128xf32> to vector<32x128xbf16>
    %44 = vector.extract_strided_slice %9 {offsets = [64, 0], sizes = [32, 128], strides = [1, 1]} : vector<128x128xbf16> to vector<32x128xbf16>
    %c64 = arith.constant 64 : index
    %c0_21 = arith.constant 0 : index
    %45 = vector.load %arg8[%c64, %c0_21] : memref<256x256xbf16, #tpu.memory_space<vmem>>, vector<32x256xbf16>
    %c192 = arith.constant 192 : index
    %c0_22 = arith.constant 0 : index
    %46 = vector.load %arg8[%c192, %c0_22] : memref<256x256xbf16, #tpu.memory_space<vmem>>, vector<32x256xbf16>
    %cst_23 = arith.constant dense<0.000000e+00> : vector<256x128xf32>
    %47 = tpu.matmul %45, %44, %cst_23 {dimension_numbers = #tpu.dot_dimension_numbers<[0], [0], [1], [1], [0, 1, 1, 1], [], []>} : vector<32x256xbf16>, vector<32x128xbf16>, vector<256x128xf32> -> vector<256x128xf32>
    %cst_24 = arith.constant dense<0xFF800000> : vector<128xf32>
    %48 = vector.multi_reduction <maximumf>, %47, %cst_24 [0] : vector<256x128xf32> to vector<128xf32>
    %49 = vector.shape_cast %48 : vector<128xf32> to vector<1x128xf32>
    %50 = vector.broadcast %49 : vector<1x128xf32> to vector<256x128xf32>
    %51 = arith.subf %47, %50 : vector<256x128xf32>
    %52 = math.exp %51 : vector<256x128xf32>
    %cst_25 = arith.constant dense<0.000000e+00> : vector<128xf32>
    %53 = vector.multi_reduction <add>, %52, %cst_25 [0] : vector<256x128xf32> to vector<128xf32>
    %54 = vector.shape_cast %53 : vector<128xf32> to vector<1x128xf32>
    %55 = arith.truncf %52 : vector<256x128xf32> to vector<256x128xbf16>
    %cst_26 = arith.constant dense<0.000000e+00> : vector<32x128xf32>
    %56 = tpu.matmul %46, %55, %cst_26 {dimension_numbers = #tpu.dot_dimension_numbers<[1], [0], [0], [1], [0, 0, 1, 1], [], []>} : vector<32x256xbf16>, vector<256x128xbf16>, vector<32x128xf32> -> vector<32x128xf32>
    %57 = tpu.reciprocal %54 {approx = true} : vector<1x128xf32> -> vector<1x128xf32>
    %58 = vector.broadcast %57 : vector<1x128xf32> to vector<32x128xf32>
    %59 = arith.mulf %56, %58 : vector<32x128xf32>
    %60 = arith.truncf %59 : vector<32x128xf32> to vector<32x128xbf16>
    %61 = vector.extract_strided_slice %9 {offsets = [96, 0], sizes = [32, 128], strides = [1, 1]} : vector<128x128xbf16> to vector<32x128xbf16>
    %c96 = arith.constant 96 : index
    %c0_27 = arith.constant 0 : index
    %62 = vector.load %arg8[%c96, %c0_27] : memref<256x256xbf16, #tpu.memory_space<vmem>>, vector<32x256xbf16>
    %c224 = arith.constant 224 : index
    %c0_28 = arith.constant 0 : index
    %63 = vector.load %arg8[%c224, %c0_28] : memref<256x256xbf16, #tpu.memory_space<vmem>>, vector<32x256xbf16>
    %cst_29 = arith.constant dense<0.000000e+00> : vector<256x128xf32>
    %64 = tpu.matmul %62, %61, %cst_29 {dimension_numbers = #tpu.dot_dimension_numbers<[0], [0], [1], [1], [0, 1, 1, 1], [], []>} : vector<32x256xbf16>, vector<32x128xbf16>, vector<256x128xf32> -> vector<256x128xf32>
    %cst_30 = arith.constant dense<0xFF800000> : vector<128xf32>
    %65 = vector.multi_reduction <maximumf>, %64, %cst_30 [0] : vector<256x128xf32> to vector<128xf32>
    %66 = vector.shape_cast %65 : vector<128xf32> to vector<1x128xf32>
    %67 = vector.broadcast %66 : vector<1x128xf32> to vector<256x128xf32>
    %68 = arith.subf %64, %67 : vector<256x128xf32>
    %69 = math.exp %68 : vector<256x128xf32>
    %cst_31 = arith.constant dense<0.000000e+00> : vector<128xf32>
    %70 = vector.multi_reduction <add>, %69, %cst_31 [0] : vector<256x128xf32> to vector<128xf32>
    %71 = vector.shape_cast %70 : vector<128xf32> to vector<1x128xf32>
    %72 = arith.truncf %69 : vector<256x128xf32> to vector<256x128xbf16>
    %cst_32 = arith.constant dense<0.000000e+00> : vector<32x128xf32>
    %73 = tpu.matmul %63, %72, %cst_32 {dimension_numbers = #tpu.dot_dimension_numbers<[1], [0], [0], [1], [0, 0, 1, 1], [], []>} : vector<32x256xbf16>, vector<256x128xbf16>, vector<32x128xf32> -> vector<32x128xf32>
    %74 = tpu.reciprocal %71 {approx = true} : vector<1x128xf32> -> vector<1x128xf32>
    %75 = vector.broadcast %74 : vector<1x128xf32> to vector<32x128xf32>
    %76 = arith.mulf %73, %75 : vector<32x128xf32>
    %77 = arith.truncf %76 : vector<32x128xf32> to vector<32x128xbf16>
    %78 = tpu.concatenate %26, %43, %60, %77 in 0 : vector<32x128xbf16>, vector<32x128xbf16>, vector<32x128xbf16>, vector<32x128xbf16> -> vector<128x128xbf16>
    %c0_33 = arith.constant 0 : index
    %c0_34 = arith.constant 0 : index
    %79 = vector.load %arg5[%c0_33, %c0_34] : memref<128x4xbf16, #tpu.memory_space<vmem>>, vector<128x4xbf16>
    %cst_35 = arith.constant dense<0.000000e+00> : vector<4x128xf32>
    %80 = tpu.matmul %79, %78, %cst_35 {dimension_numbers = #tpu.dot_dimension_numbers<[0], [0], [1], [1], [0, 1, 1, 1], [], []>} : vector<128x4xbf16>, vector<128x128xbf16>, vector<4x128xf32> -> vector<4x128xf32>
    %c0_36 = arith.constant 0 : index
    %c0_37 = arith.constant 0 : index
    %81 = vector.load %arg6[%c0_36, %c0_37] : memref<4x1xf32, #tpu.memory_space<vmem>>, vector<4x1xf32>
    %82 = vector.broadcast %81 : vector<4x1xf32> to vector<4x128xf32>
    %83 = arith.addf %80, %82 : vector<4x128xf32>
    %c0_38 = arith.constant 0 : index
    %c0_39 = arith.constant 0 : index
    %c0_40 = arith.constant 0 : index
    %84 = vector.load %arg7[%c0_38, %c0_39, %c0_40] : memref<1x4x128xf32, #tpu.memory_space<vmem>>, vector<1x4x128xf32>
    %85 = vector.shape_cast %84 : vector<1x4x128xf32> to vector<4x128xf32>
    %86 = vector.shape_cast %83 : vector<4x128xf32> to vector<1x4x128xf32>
    tpu.vector_store %arg7[%c0_38, %c0_39, %c0_40], %86 {strides = array<i32>} : memref<1x4x128xf32, #tpu.memory_space<vmem>>, vector<1x4x128xf32>,
    return
  }
  func.func @transform_0(%arg0: i32, %arg1: i32) -> (i32, i32, i32) {
    %c0_i32 = arith.constant 0 : i32
    %c0_i32_0 = arith.constant 0 : i32
    %c0_i32_1 = arith.constant 0 : i32
    return %arg0, %c0_i32, %c0_i32_0 : i32, i32, i32
  }
  func.func @transform_1(%arg0: i32, %arg1: i32) -> (i32, i32, i32) {
    %c0_i32 = arith.constant 0 : i32
    %c0_i32_0 = arith.constant 0 : i32
    return %arg0, %c0_i32, %arg1 : i32, i32, i32
  }
  func.func @transform_2(%arg0: i32, %arg1: i32) -> (i32, i32) {
    %c0_i32 = arith.constant 0 : i32
    %c0_i32_0 = arith.constant 0 : i32
    %c0_i32_1 = arith.constant 0 : i32
    return %c0_i32, %c0_i32_0 : i32, i32
  }
  func.func @transform_3(%arg0: i32, %arg1: i32) -> (i32, i32) {
    %c0_i32 = arith.constant 0 : i32
    %c0_i32_0 = arith.constant 0 : i32
    %c0_i32_1 = arith.constant 0 : i32
    return %c0_i32, %c0_i32_0 : i32, i32
  }
  func.func @transform_4(%arg0: i32, %arg1: i32) -> (i32, i32) {
    %c0_i32 = arith.constant 0 : i32
    %c0_i32_0 = arith.constant 0 : i32
    %c0_i32_1 = arith.constant 0 : i32
    return %c0_i32, %c0_i32_0 : i32, i32
  }
  func.func @transform_5(%arg0: i32, %arg1: i32) -> (i32, i32, i32) {
    %c0_i32 = arith.constant 0 : i32
    %c0_i32_0 = arith.constant 0 : i32
    return %arg0, %c0_i32, %arg1 : i32, i32, i32
  }
}

</mosaic_0001>

<llo_original>
// kernel: tpu_custom_call.1
$region0: #{tpu_custom_call.1}
  #allocation0 [shape = 'u32[]', space=smem, size = 0x4, offset = 0x4, fixed_abs, tag = 'smem constant byte address 0x4 - core index']
  #allocation1 [shape = 'u32[144,128]{1,0:T(1,128)}', space=vmem, size = 0x12000, scoped, tag = 'internal scratch']
  #allocation2 [shape = 'bf16[256,256]{1,0:T(16,128)(2,1)}', space=vmem, size = 0x20000, scoped, tag = 'scratch operand']
  %s0 = inlined_call_operand.vmem [shape: bf16[2,4,256], index: 0, kind: input, shape index: {}]
  %s1 = inlined_call_operand.vmem [shape: bf16[2,4,256], index: 1, kind: input, shape index: {}]
  %s2 = inlined_call_operand.vmem [shape: bf16[384,4], index: 2, kind: input, shape index: {}]
  %s3 = inlined_call_operand.vmem [shape: bf16[128,4], index: 3, kind: input, shape index: {}]
  %s4 = inlined_call_operand.vmem [shape: f32[4,1], index: 4, kind: input, shape index: {}]
  %s5 = inlined_call_operand.hbm [shape: f32[2,4,256], index: 5, kind: output, shape index: {}]
  %s6 = sld [smem:[#allocation0]]
  $region57: #{tpu_custom_call.1} parent=0
    _
  %s8 = ssub.s32 1, %s6
  %s9 = scalar_select 0, %s8, %s6
  $region1: #{tpu_custom_call.1} parent=0
    #allocation3 [shape = 'u8[4096]{0}', space=vmem, size = 0x1000, scoped, tag = 'output window, operand 0']
    #allocation4 [shape = 's32[2]{0}', space=sflag, size = 0x8, scoped, tag = 'scoped memory for tpu_custom_call.1']
    %10 = vsyncpa [#allocation4], 0
    %s11 = scalar_lea.sflag [#allocation4], 1
    %12 = vsyncpa %s11, 0
    loop: start=0, step=1, limit=6
    $region2: #{tpu_custom_call.1} parent=1 // loop_pre_header
      _
    $region3: #{tpu_custom_call.1} parent=1 // loop_header
      %s14 = sphi 0, %s18
      %p15 = scmp.ge.s32.totalorder %s14, 6
      %s21 = sphi 0, %s33
      %s22 = sphi 0, %s29
      %s23 = sphi 0, %s21
      %s24 = sphi 0, %s22
      %s25 = sphi 0, %s23
      %s26 = sphi 0, %s24
      %s36 = sphi 0, %s38
      %s39 = sphi 0, %s36
      %s40 = sphi 0, %s39
      %s56 = sphi 0, %s40
      %s64 = sphi 0, %s66
      %s67 = sphi 0, %s64
      %s68 = sphi 0, %s67
      %s84 = sphi 0, %s68
      %s88 = sphi 0, %s88
      %s90 = sphi 0, %s88
      %s91 = sphi 0, %s90
      %s105 = sphi 0, %s91
      %s109 = sphi 0, %s109
      %s111 = sphi 0, %s109
      %s112 = sphi 0, %s111
      %s126 = sphi 0, %s112
      %s130 = sphi 0, %s130
      %s132 = sphi 0, %s130
      %s133 = sphi 0, %s132
      %s147 = sphi 0, %s133
      %s155 = sphi 0, %s157
      %s158 = sphi 0, %s155
      %s159 = sphi 0, %s158
      %s175 = sphi 0, %s159
    $region4: #{tpu_custom_call.1} parent=1 // loop_header_branch
      %17 = sbr.rel (%p15) target = $region8
    $region5: #{tpu_custom_call.1} parent=1 // loop_body
      %s19 = ssub.s32 %s14, 1
      %s20 = ssub.s32 %s14, 2
      %s27 = sadd.s32 1, %s22
      %p28 = scmp.ge.s32.totalorder %s27, 2
      %s29 = scalar_select %p28, 0, %s27
      %s30 = sadd.s32 1, %s21
      %s31 = scalar_select %p28, %s30, %s21
      %p32 = scmp.ge.s32.totalorder %s31, 2
      %s33 = scalar_select %p32, 0, %s31
      %s34 = ssub.s32 %s21, %s33
      %p35 = scmp.eq.s32.totalorder %s34, 0
      %s37 = sadd.s32 %s36, 1
      %s38 = scalar_select %p35, %s36, %s37
      %p41 = pneg %p35
      %p42 = scmp.eq.s32.totalorder %s14, 3
      %p43 = por %p41, %p42
      %p44 = scmp.ne.s32.totalorder %s36, %s39
      %p45 = scmp.eq.s32.totalorder %s14, 0
      %p46 = por %p44, %p45
      %p47 = scmp.ne.s32.totalorder %s36, %s39
      %p48 = scmp.eq.s32.totalorder %s19, 3
      %p49 = por %p47, %p48
      %p50 = scmp.ne.s32.totalorder %s39, %s40
      %p51 = scmp.eq.s32.totalorder %s19, 0
      %p52 = por %p50, %p51
      %p53 = scmp.ne.s32.totalorder %s39, %s40
      %p54 = scmp.eq.s32.totalorder %s20, 3
      %p55 = por %p53, %p54
      %p57 = scmp.ne.s32.totalorder %s40, %s56
      %p58 = scmp.eq.s32.totalorder %s20, 0
      %p59 = por %p57, %p58
      %s60 = ssub.s32 %s21, %s33
      %s61 = ssub.s32 %s22, %s29
      %s62 = sor.u32 %s60, %s61
      %p63 = scmp.eq.s32.totalorder %s62, 0
      %s65 = sadd.s32 %s64, 1
      %s66 = scalar_select %p63, %s64, %s65
      %p69 = pneg %p63
      %p70 = scmp.eq.s32.totalorder %s14, 3
      %p71 = por %p69, %p70
      %p72 = scmp.ne.s32.totalorder %s64, %s67
      %p73 = scmp.eq.s32.totalorder %s14, 0
      %p74 = por %p72, %p73
      %p75 = scmp.ne.s32.totalorder %s64, %s67
      %p76 = scmp.eq.s32.totalorder %s19, 3
      %p77 = por %p75, %p76
      %p78 = scmp.ne.s32.totalorder %s67, %s68
      %p79 = scmp.eq.s32.totalorder %s19, 0
      %p80 = por %p78, %p79
      %p81 = scmp.ne.s32.totalorder %s67, %s68
      %p82 = scmp.eq.s32.totalorder %s20, 3
      %p83 = por %p81, %p82
      %p85 = scmp.ne.s32.totalorder %s68, %s84
      %p86 = scmp.eq.s32.totalorder %s20, 0
      %p87 = por %p85, %p86
      %s89 = sadd.s32 %s88, 1
      %p92 = scmp.eq.s32.totalorder %s14, 3
      %p93 = scmp.ne.s32.totalorder %s88, %s90
      %p94 = scmp.eq.s32.totalorder %s14, 0
      %p95 = por %p93, %p94
      %p96 = scmp.ne.s32.totalorder %s88, %s90
      %p97 = scmp.eq.s32.totalorder %s19, 3
      %p98 = por %p96, %p97
      %p99 = scmp.ne.s32.totalorder %s90, %s91
      %p100 = scmp.eq.s32.totalorder %s19, 0
      %p101 = por %p99, %p100
      %p102 = scmp.ne.s32.totalorder %s90, %s91
      %p103 = scmp.eq.s32.totalorder %s20, 3
      %p104 = por %p102, %p103
      %p106 = scmp.ne.s32.totalorder %s91, %s105
      %p107 = scmp.eq.s32.totalorder %s20, 0
      %p108 = por %p106, %p107
      %s110 = sadd.s32 %s109, 1
      %p113 = scmp.eq.s32.totalorder %s14, 3
      %p114 = scmp.ne.s32.totalorder %s109, %s111
      %p115 = scmp.eq.s32.totalorder %s14, 0
      %p116 = por %p114, %p115
      %p117 = scmp.ne.s32.totalorder %s109, %s111
      %p118 = scmp.eq.s32.totalorder %s19, 3
      %p119 = por %p117, %p118
      %p120 = scmp.ne.s32.totalorder %s111, %s112
      %p121 = scmp.eq.s32.totalorder %s19, 0
      %p122 = por %p120, %p121
      %p123 = scmp.ne.s32.totalorder %s111, %s112
      %p124 = scmp.eq.s32.totalorder %s20, 3
      %p125 = por %p123, %p124
      %p127 = scmp.ne.s32.totalorder %s112, %s126
      %p128 = scmp.eq.s32.totalorder %s20, 0
      %p129 = por %p127, %p128
      %s131 = sadd.s32 %s130, 1
      %p134 = scmp.eq.s32.totalorder %s14, 3
      %p135 = scmp.ne.s32.totalorder %s130, %s132
      %p136 = scmp.eq.s32.totalorder %s14, 0
      %p137 = por %p135, %p136
      %p138 = scmp.ne.s32.totalorder %s130, %s132
      %p139 = scmp.eq.s32.totalorder %s19, 3
      %p140 = por %p138, %p139
      %p141 = scmp.ne.s32.totalorder %s132, %s133
      %p142 = scmp.eq.s32.totalorder %s19, 0
      %p143 = por %p141, %p142
      %p144 = scmp.ne.s32.totalorder %s132, %s133
      %p145 = scmp.eq.s32.totalorder %s20, 3
      %p146 = por %p144, %p145
      %p148 = scmp.ne.s32.totalorder %s133, %s147
      %p149 = scmp.eq.s32.totalorder %s20, 0
      %p150 = por %p148, %p149
      %s151 = ssub.s32 %s21, %s33
      %s152 = ssub.s32 %s22, %s29
      %s153 = sor.u32 %s151, %s152
      %p154 = scmp.eq.s32.totalorder %s153, 0
      %s156 = sadd.s32 %s155, 1
      %s157 = scalar_select %p154, %s155, %s156
      %p160 = pneg %p154
      %p161 = scmp.eq.s32.totalorder %s14, 3
      %p162 = por %p160, %p161
      %p163 = scmp.ne.s32.totalorder %s155, %s158
      %p164 = scmp.eq.s32.totalorder %s14, 0
      %p165 = por %p163, %p164
      %p166 = scmp.ne.s32.totalorder %s155, %s158
      %p167 = scmp.eq.s32.totalorder %s19, 3
      %p168 = por %p166, %p167
      %p169 = scmp.ne.s32.totalorder %s158, %s159
      %p170 = scmp.eq.s32.totalorder %s19, 0
      %p171 = por %p169, %p170
      %p172 = scmp.ne.s32.totalorder %s158, %s159
      %p173 = scmp.eq.s32.totalorder %s20, 3
      %p174 = por %p172, %p173
      %p176 = scmp.ne.s32.totalorder %s159, %s175
      %p177 = scmp.eq.s32.totalorder %s20, 0
      %p178 = por %p176, %p177
      %p179 = scmp.le.s32.totalorder 1, %s14
      %p180 = scmp.lt.s32.totalorder %s14, 5
      %p181 = pnand %p179, %p180
      %p182 = pneg %p181
      // Predicated region
      $region9: #{tpu_custom_call.1} parent=5 // pred_check
        _
      $region10: #{tpu_custom_call.1} parent=5 // pred_check_branch
        %184 = sbr.rel (%p181) target = $region12
      $region11: #{tpu_custom_call.1} parent=5 // pred_region
        %s185 = ssub.s32 %s14, 1
        // Predicated region
        $region13: #{tpu_custom_call.1} parent=11 // pred_check
          %p186 = pneg %p101
        $region14: #{tpu_custom_call.1} parent=11 // pred_check_branch
          %188 = sbr.rel (%p186) target = $region16
        $region15: #{tpu_custom_call.1} parent=11 // pred_region
          _
        $region16: #{tpu_custom_call.1} parent=11 // pred_fallthru
          _
        // Predicated region
        $region17: #{tpu_custom_call.1} parent=11 // pred_check
          %p189 = pneg %p122
        $region18: #{tpu_custom_call.1} parent=11 // pred_check_branch
          %191 = sbr.rel (%p189) target = $region20
        $region19: #{tpu_custom_call.1} parent=11 // pred_region
          _
        $region20: #{tpu_custom_call.1} parent=11 // pred_fallthru
          _
        // Predicated region
        $region21: #{tpu_custom_call.1} parent=11 // pred_check
          %p192 = pneg %p143
        $region22: #{tpu_custom_call.1} parent=11 // pred_check_branch
          %194 = sbr.rel (%p192) target = $region24
        $region23: #{tpu_custom_call.1} parent=11 // pred_region
          _
        $region24: #{tpu_custom_call.1} parent=11 // pred_fallthru
          _
      $region12: #{tpu_custom_call.1} parent=5 // pred_fallthru
        _
      %p195 = scmp.lt.s32.totalorder %s14, 4
      // Predicated region
      $region25: #{tpu_custom_call.1} parent=5 // pred_check
        %p196 = pneg %p195
      $region26: #{tpu_custom_call.1} parent=5 // pred_check_branch
        %198 = sbr.rel (%p196) target = $region28
      $region27: #{tpu_custom_call.1} parent=5 // pred_region
        // Predicated region
        $region29: #{tpu_custom_call.1} parent=27 // pred_check
          %p199 = pneg %p46
        $region30: #{tpu_custom_call.1} parent=27 // pred_check_branch
          %201 = sbr.rel (%p199) target = $region32
        $region31: #{tpu_custom_call.1} parent=27 // pred_region
          %p202 = scmp.lt.s32.totalorder %s21, 1
          %s203 = scalar_select %p202, %s21, 1
          %s204 = smul.addr %s203, 2
          %s205 = smul.addr %s204, 2
          %s206 = scalar_lea.vmem %s0, %s205
        $region32: #{tpu_custom_call.1} parent=27 // pred_fallthru
          _
        // Predicated region
        $region33: #{tpu_custom_call.1} parent=27 // pred_check
          %p207 = pneg %p74
        $region34: #{tpu_custom_call.1} parent=27 // pred_check_branch
          %209 = sbr.rel (%p207) target = $region36
        $region35: #{tpu_custom_call.1} parent=27 // pred_region
          %p210 = scmp.lt.s32.totalorder %s21, 1
          %s211 = scalar_select %p210, %s21, 1
          %p212 = scmp.lt.s32.totalorder %s22, 1
          %s213 = scalar_select %p212, %s22, 1
          %s214 = smul.addr %s211, 2
          %s215 = sadd.s32 %s213, %s214
          %s216 = smul.addr %s215, 2
          %s217 = scalar_lea.vmem %s1, %s216
        $region36: #{tpu_custom_call.1} parent=27 // pred_fallthru
          _
      $region28: #{tpu_custom_call.1} parent=5 // pred_fallthru
        _
      %p218 = scmp.le.s32.totalorder 1, %s14
      %p219 = scmp.lt.s32.totalorder %s14, 5
      %p220 = pnand %p218, %p219
      %p221 = pneg %p220
      // Predicated region
      $region37: #{tpu_custom_call.1} parent=5 // pred_check
        _
      $region38: #{tpu_custom_call.1} parent=5 // pred_check_branch
        %223 = sbr.rel (%p220) target = $region40
      $region39: #{tpu_custom_call.1} parent=5 // pred_region
        %s224 = ssub.s32 %s14, 1
        %p225 = scmp.lt.s32.totalorder %s23, 1
        %s226 = scalar_select %p225, %s23, 1
        %s227 = smul.addr %s226, 2
        %s228 = smul.addr %s227, 2
        %s229 = scalar_lea.vmem %s0, %s228
        %p230 = pneg %p52
        %p231 = pneg %p49
        %p232 = scmp.lt.s32.totalorder %s23, 1
        %s233 = scalar_select %p232, %s23, 1
        %p234 = scmp.lt.s32.totalorder %s24, 1
        %s235 = scalar_select %p234, %s24, 1
        %s236 = smul.addr %s233, 2
        %s237 = sadd.s32 %s235, %s236
        %s238 = smul.addr %s237, 2
        %s239 = scalar_lea.vmem %s1, %s238
        %p240 = pneg %p80
        %p241 = pneg %p77
        %p242 = pneg %p101
        %p243 = pneg %p98
        %p244 = pneg %p122
        %p245 = pneg %p119
        %p246 = pneg %p143
        %p247 = pneg %p140
        %p248 = pneg %p171
        %p249 = pneg %p168
        %s250 = sand.u32 %s158, 1
        %s251 = scalar_lea.sflag [#allocation4], %s250
        %s252 = sand.u32 %s158, 1
        %s253 = smul.addr %s252, 4
        %s254 = scalar_lea.vmem [#allocation3], %s253
        %p255 = scmp.lt.s32.totalorder %s23, 1
        %s256 = scalar_select %p255, %s23, 1
        %s257 = smul.addr %s256, 2
        %s258 = smul.addr %s257, 2
        %s259 = scalar_lea.vmem %s0, %s258
        %p260 = scmp.lt.s32.totalorder %s23, 1
        %s261 = scalar_select %p260, %s23, 1
        %p262 = scmp.lt.s32.totalorder %s24, 1
        %s263 = scalar_select %p262, %s24, 1
        %s264 = smul.addr %s261, 2
        %s265 = sadd.s32 %s263, %s264
        %s266 = smul.addr %s265, 2
        %s267 = scalar_lea.vmem %s1, %s266
        %v269 = vld [vmem:[%s259] sm:$0xf]
        %p270 = scmp.eq.s32.totalorder %s24, 0
        // Predicated region
        $region41: #{tpu_custom_call.1} parent=39 // pred_check
          %p271 = pneg %p270
        $region42: #{tpu_custom_call.1} parent=39 // pred_check_branch
          %273 = sbr.rel (%p271) target = $region44
        $region43: #{tpu_custom_call.1} parent=39 // pred_region
          %v274 = vld [vmem:[%s2 + $0x40] sm:$0xf]
          %v275 = vld [vmem:[%s2 + $0x44] sm:$0xf]
          %v276 = vld [vmem:[%s2 + $0x48] sm:$0xf]
          %v277 = vld [vmem:[%s2 + $0x4c] sm:$0xf]
          %v278 = vld [vmem:[%s2 + $0x50] sm:$0xf]
          %v279 = vld [vmem:[%s2 + $0x54] sm:$0xf]
          %v280 = vld [vmem:[%s2 + $0x58] sm:$0xf]
          %v281 = vld [vmem:[%s2 + $0x5c] sm:$0xf]
          %v282 = vld [vmem:[%s2 + $0x60] sm:$0xf]
          %v283 = vld [vmem:[%s2 + $0x64] sm:$0xf]
          %v284 = vld [vmem:[%s2 + $0x68] sm:$0xf]
          %v285 = vld [vmem:[%s2 + $0x6c] sm:$0xf]
          %v286 = vld [vmem:[%s2 + $0x70] sm:$0xf]
          %v287 = vld [vmem:[%s2 + $0x74] sm:$0xf]
          %v288 = vld [vmem:[%s2 + $0x78] sm:$0xf]
          %v289 = vld [vmem:[%s2 + $0x7c] sm:$0xf]
          %v290 = vld [vmem:[%s2 + $0x80] sm:$0xf]
          %v291 = vld [vmem:[%s2 + $0x84] sm:$0xf]
          %v292 = vld [vmem:[%s2 + $0x88] sm:$0xf]
          %v293 = vld [vmem:[%s2 + $0x8c] sm:$0xf]
          %v294 = vld [vmem:[%s2 + $0x90] sm:$0xf]
          %v295 = vld [vmem:[%s2 + $0x94] sm:$0xf]
          %v296 = vld [vmem:[%s2 + $0x98] sm:$0xf]
          %v297 = vld [vmem:[%s2 + $0x9c] sm:$0xf]
          %v298 = vld [vmem:[%s2 + $0xa0] sm:$0xf]
          %v299 = vld [vmem:[%s2 + $0xa4] sm:$0xf]
          %v300 = vld [vmem:[%s2 + $0xa8] sm:$0xf]
          %v301 = vld [vmem:[%s2 + $0xac] sm:$0xf]
          %v302 = vld [vmem:[%s2 + $0xb0] sm:$0xf]
          %v303 = vld [vmem:[%s2 + $0xb4] sm:$0xf]
          %v304 = vld [vmem:[%s2 + $0xb8] sm:$0xf]
          %v305 = vld [vmem:[%s2 + $0xbc] sm:$0xf]
          %v338 = vunpack.c.l.b16 %v274
          %v339 = vunpack.c.l.b16 %v275
          %v340 = vunpack.c.l.b16 %v276
          %v341 = vunpack.c.l.b16 %v277
          %v342 = vunpack.c.l.b16 %v278
          %v343 = vunpack.c.l.b16 %v279
          %v344 = vunpack.c.l.b16 %v280
          %v345 = vunpack.c.l.b16 %v281
          %v346 = vunpack.c.l.b16 %v282
          %v347 = vunpack.c.l.b16 %v283
          %v348 = vunpack.c.l.b16 %v284
          %v349 = vunpack.c.l.b16 %v285
          %v350 = vunpack.c.l.b16 %v286
          %v351 = vunpack.c.l.b16 %v287
          %v352 = vunpack.c.l.b16 %v288
          %v353 = vunpack.c.l.b16 %v289
          %v354 = vunpack.c.l.b16 %v290
          %v355 = vunpack.c.l.b16 %v291
          %v356 = vunpack.c.l.b16 %v292
          %v357 = vunpack.c.l.b16 %v293
          %v358 = vunpack.c.l.b16 %v294
          %v359 = vunpack.c.l.b16 %v295
          %v360 = vunpack.c.l.b16 %v296
          %v361 = vunpack.c.l.b16 %v297
          %v362 = vunpack.c.l.b16 %v298
          %v363 = vunpack.c.l.b16 %v299
          %v364 = vunpack.c.l.b16 %v300
          %v365 = vunpack.c.l.b16 %v301
          %v366 = vunpack.c.l.b16 %v302
          %v367 = vunpack.c.l.b16 %v303
          %v368 = vunpack.c.l.b16 %v304
          %v369 = vunpack.c.l.b16 %v305
          %v370 = vpack.c.b16 %v339, %v338
          %v371 = vpack.c.b16 %v341, %v340
          %v372 = vpack.c.b16 %v343, %v342
          %v373 = vpack.c.b16 %v345, %v344
          %v374 = vpack.c.b16 %v347, %v346
          %v375 = vpack.c.b16 %v349, %v348
          %v376 = vpack.c.b16 %v351, %v350
          %v377 = vpack.c.b16 %v353, %v352
          %v378 = vpack.c.b16 %v355, %v354
          %v379 = vpack.c.b16 %v357, %v356
          %v380 = vpack.c.b16 %v359, %v358
          %v381 = vpack.c.b16 %v361, %v360
          %v382 = vpack.c.b16 %v363, %v362
          %v383 = vpack.c.b16 %v365, %v364
          %v384 = vpack.c.b16 %v367, %v366
          %v385 = vpack.c.b16 %v369, %v368
          %v388 = vunpack.c.l.s4 1983009808
          %v389 = vunpack.c.0.s8 %v388
          %v390 = vlaneseq
          %v391 = vshrl.u32 %v390, 7
          %v392 = vsub.s32 %v389, %v391
          %v393 = vrot.slane %v269, %v392
          %v394 = vcombine.high %v393, %v393
          %vm395 = vcmask 31744
          %v397 = vsel %vm395, %v370, 0
          %v400 = vsel %vm395, %v371, 0
          %v403 = vsel %vm395, %v372, 0
          %v406 = vsel %vm395, %v373, 0
          %v409 = vsel %vm395, %v374, 0
          %v412 = vsel %vm395, %v375, 0
          %v415 = vsel %vm395, %v376, 0
          %v418 = vsel %vm395, %v377, 0
          %v421 = vsel %vm395, %v378, 0
          %v424 = vsel %vm395, %v379, 0
          %v427 = vsel %vm395, %v380, 0
          %v430 = vsel %vm395, %v381, 0
          %v433 = vsel %vm395, %v382, 0
          %v436 = vsel %vm395, %v383, 0
          %v439 = vsel %vm395, %v384, 0
          %v442 = vsel %vm395, %v385, 0
          %vm444 = vcmask 1041408
          %v446 = vsel %vm444, %v393, 0
          %v449 = vsel %vm444, %v394, 0
          %451 = vmatprep.subr.bf16.mxu0 %v449
          %452 = vmatpush1.bf16.msra.mxu0 %v446
          %453 = vmatprep.subr.bf16.mxu0 0
          %454 = vmatpush1.bf16.msra.mxu0 0
          %455 = vmatprep.subr.bf16.mxu0 0
          %456 = vmatpush1.bf16.msra.mxu0 0
          %457 = vmatprep.subr.bf16.mxu0 0
          %458 = vmatpush1.bf16.msra.mxu0 0
          %459 = vmatprep.subr.bf16.mxu0 0
          %460 = vmatpush1.bf16.msra.mxu0 0
          %461 = vmatprep.subr.bf16.mxu0 0
          %462 = vmatpush1.bf16.msra.mxu0 0
          %463 = vmatprep.subr.bf16.mxu0 0
          %464 = vmatpush1.bf16.msra.mxu0 0
          %465 = vmatprep.subr.bf16.mxu0 0
          %466 = vmatpush1.bf16.msra.mxu0 0
          %467 = vmatprep.subr.bf16.mxu0 0
          %468 = vmatpush1.bf16.msra.mxu0 0
          %469 = vmatprep.subr.bf16.mxu0 0
          %470 = vmatpush1.bf16.msra.mxu0 0
          %471 = vmatprep.subr.bf16.mxu0 0
          %472 = vmatpush1.bf16.msra.mxu0 0
          %473 = vmatprep.subr.bf16.mxu0 0
          %474 = vmatpush1.bf16.msra.mxu0 0
          %475 = vmatprep.subr.bf16.mxu0 0
          %476 = vmatpush1.bf16.msra.mxu0 0
          %477 = vmatprep.subr.bf16.mxu0 0
          %478 = vmatpush1.bf16.msra.mxu0 0
          %479 = vmatprep.subr.bf16.mxu0 0
          %480 = vmatpush1.bf16.msra.mxu0 0
          %481 = vmatprep.subr.bf16.mxu0 0
          %482 = vmatpush1.bf16.msra.mxu0 0
          %483 = vmatprep.mubr.bf16.mxu0 0
          %484 = vmatmul.mubr.bf16.gmra.mrb[0].mxu0 %v397
          %v485 = vpop.f32.mrb[0].mxu0
          %v486 = vadd.f32 0.0, %v485
          %v487 = vpop.f32.mrb[0].mxu0
          %v488 = vadd.f32 0.0, %v487
          %v489 = vpop.f32.mrb[0].mxu0
          %v490 = vadd.f32 0.0, %v489
          %v491 = vpop.f32.mrb[0].mxu0
          %v492 = vadd.f32 0.0, %v491
          %493 = vmatprep.mubr.bf16.mxu0 0
          %494 = vmatmul.mubr.bf16.gmra.mrb[0].mxu0 %v400
          %v495 = vpop.f32.mrb[0].mxu0
          %v496 = vadd.f32 0.0, %v495
          %v497 = vpop.f32.mrb[0].mxu0
          %v498 = vadd.f32 0.0, %v497
          %v499 = vpop.f32.mrb[0].mxu0
          %v500 = vadd.f32 0.0, %v499
          %v501 = vpop.f32.mrb[0].mxu0
          %v502 = vadd.f32 0.0, %v501
          %503 = vmatprep.mubr.bf16.mxu0 0
          %504 = vmatmul.mubr.bf16.gmra.mrb[0].mxu0 %v403
          %v505 = vpop.f32.mrb[0].mxu0
          %v506 = vadd.f32 0.0, %v505
          %v507 = vpop.f32.mrb[0].mxu0
          %v508 = vadd.f32 0.0, %v507
          %v509 = vpop.f32.mrb[0].mxu0
          %v510 = vadd.f32 0.0, %v509
          %v511 = vpop.f32.mrb[0].mxu0
          %v512 = vadd.f32 0.0, %v511
          %513 = vmatprep.mubr.bf16.mxu0 0
          %514 = vmatmul.mubr.bf16.gmra.mrb[0].mxu0 %v406
          %v515 = vpop.f32.mrb[0].mxu0
          %v516 = vadd.f32 0.0, %v515
          %v517 = vpop.f32.mrb[0].mxu0
          %v518 = vadd.f32 0.0, %v517
          %v519 = vpop.f32.mrb[0].mxu0
          %v520 = vadd.f32 0.0, %v519
          %v521 = vpop.f32.mrb[0].mxu0
          %v522 = vadd.f32 0.0, %v521
          %523 = vmatprep.mubr.bf16.mxu0 0
          %524 = vmatmul.mubr.bf16.gmra.mrb[0].mxu0 %v409
          %v525 = vpop.f32.mrb[0].mxu0
          %v526 = vadd.f32 0.0, %v525
          %v527 = vpop.f32.mrb[0].mxu0
          %v528 = vadd.f32 0.0, %v527
          %v529 = vpop.f32.mrb[0].mxu0
          %v530 = vadd.f32 0.0, %v529
          %v531 = vpop.f32.mrb[0].mxu0
          %v532 = vadd.f32 0.0, %v531
          %533 = vmatprep.mubr.bf16.mxu0 0
          %534 = vmatmul.mubr.bf16.gmra.mrb[0].mxu0 %v412
          %v535 = vpop.f32.mrb[0].mxu0
          %v536 = vadd.f32 0.0, %v535
          %v537 = vpop.f32.mrb[0].mxu0
          %v538 = vadd.f32 0.0, %v537
          %v539 = vpop.f32.mrb[0].mxu0
          %v540 = vadd.f32 0.0, %v539
          %v541 = vpop.f32.mrb[0].mxu0
          %v542 = vadd.f32 0.0, %v541
          %543 = vmatprep.mubr.bf16.mxu0 0
          %544 = vmatmul.mubr.bf16.gmra.mrb[0].mxu0 %v415
          %v545 = vpop.f32.mrb[0].mxu0
          %v546 = vadd.f32 0.0, %v545
          %v547 = vpop.f32.mrb[0].mxu0
          %v548 = vadd.f32 0.0, %v547
          %v549 = vpop.f32.mrb[0].mxu0
          %v550 = vadd.f32 0.0, %v549
          %v551 = vpop.f32.mrb[0].mxu0
          %v552 = vadd.f32 0.0, %v551
          %553 = vmatprep.mubr.bf16.mxu0 0
          %554 = vmatmul.mubr.bf16.gmra.mrb[0].mxu0 %v418
          %v555 = vpop.f32.mrb[0].mxu0
          %v556 = vadd.f32 0.0, %v555
          %v557 = vpop.f32.mrb[0].mxu0
          %v558 = vadd.f32 0.0, %v557
          %v559 = vpop.f32.mrb[0].mxu0
          %v560 = vadd.f32 0.0, %v559
          %v561 = vpop.f32.mrb[0].mxu0
          %v562 = vadd.f32 0.0, %v561
          %563 = vmatprep.mubr.bf16.mxu0 0
          %564 = vmatmul.mubr.bf16.gmra.mrb[0].mxu0 %v421
          %v565 = vpop.f32.mrb[0].mxu0
          %v566 = vadd.f32 0.0, %v565
          %v567 = vpop.f32.mrb[0].mxu0
          %v568 = vadd.f32 0.0, %v567
          %v569 = vpop.f32.mrb[0].mxu0
          %v570 = vadd.f32 0.0, %v569
          %v571 = vpop.f32.mrb[0].mxu0
          %v572 = vadd.f32 0.0, %v571
          %573 = vmatprep.mubr.bf16.mxu0 0
          %574 = vmatmul.mubr.bf16.gmra.mrb[0].mxu0 %v424
          %v575 = vpop.f32.mrb[0].mxu0
          %v576 = vadd.f32 0.0, %v575
          %v577 = vpop.f32.mrb[0].mxu0
          %v578 = vadd.f32 0.0, %v577
          %v579 = vpop.f32.mrb[0].mxu0
          %v580 = vadd.f32 0.0, %v579
          %v581 = vpop.f32.mrb[0].mxu0
          %v582 = vadd.f32 0.0, %v581
          %583 = vmatprep.mubr.bf16.mxu0 0
          %584 = vmatmul.mubr.bf16.gmra.mrb[0].mxu0 %v427
          %v585 = vpop.f32.mrb[0].mxu0
          %v586 = vadd.f32 0.0, %v585
          %v587 = vpop.f32.mrb[0].mxu0
          %v588 = vadd.f32 0.0, %v587
          %v589 = vpop.f32.mrb[0].mxu0
          %v590 = vadd.f32 0.0, %v589
          %v591 = vpop.f32.mrb[0].mxu0
          %v592 = vadd.f32 0.0, %v591
          %593 = vmatprep.mubr.bf16.mxu0 0
          %594 = vmatmul.mubr.bf16.gmra.mrb[0].mxu0 %v430
          %v595 = vpop.f32.mrb[0].mxu0
          %v596 = vadd.f32 0.0, %v595
          %v597 = vpop.f32.mrb[0].mxu0
          %v598 = vadd.f32 0.0, %v597
          %v599 = vpop.f32.mrb[0].mxu0
          %v600 = vadd.f32 0.0, %v599
          %v601 = vpop.f32.mrb[0].mxu0
          %v602 = vadd.f32 0.0, %v601
          %603 = vmatprep.mubr.bf16.mxu0 0
          %604 = vmatmul.mubr.bf16.gmra.mrb[0].mxu0 %v433
          %v605 = vpop.f32.mrb[0].mxu0
          %v606 = vadd.f32 0.0, %v605
          %v607 = vpop.f32.mrb[0].mxu0
          %v608 = vadd.f32 0.0, %v607
          %v609 = vpop.f32.mrb[0].mxu0
          %v610 = vadd.f32 0.0, %v609
          %v611 = vpop.f32.mrb[0].mxu0
          %v612 = vadd.f32 0.0, %v611
          %613 = vmatprep.mubr.bf16.mxu0 0
          %614 = vmatmul.mubr.bf16.gmra.mrb[0].mxu0 %v436
          %v615 = vpop.f32.mrb[0].mxu0
          %v616 = vadd.f32 0.0, %v615
          %v617 = vpop.f32.mrb[0].mxu0
          %v618 = vadd.f32 0.0, %v617
          %v619 = vpop.f32.mrb[0].mxu0
          %v620 = vadd.f32 0.0, %v619
          %v621 = vpop.f32.mrb[0].mxu0
          %v622 = vadd.f32 0.0, %v621
          %623 = vmatprep.mubr.bf16.mxu0 0
          %624 = vmatmul.mubr.bf16.gmra.mrb[0].mxu0 %v439
          %v625 = vpop.f32.mrb[0].mxu0
          %v626 = vadd.f32 0.0, %v625
          %v627 = vpop.f32.mrb[0].mxu0
          %v628 = vadd.f32 0.0, %v627
          %v629 = vpop.f32.mrb[0].mxu0
          %v630 = vadd.f32 0.0, %v629
          %v631 = vpop.f32.mrb[0].mxu0
          %v632 = vadd.f32 0.0, %v631
          %633 = vmatprep.mubr.bf16.mxu0 0
          %634 = vmatmul.mubr.bf16.gmra.mrb[0].mxu0 %v442
          %v635 = vpop.f32.mrb[0].mxu0
          %v636 = vadd.f32 0.0, %v635
          %v637 = vpop.f32.mrb[0].mxu0
          %v638 = vadd.f32 0.0, %v637
          %v639 = vpop.f32.mrb[0].mxu0
          %v640 = vadd.f32 0.0, %v639
          %v641 = vpop.f32.mrb[0].mxu0
          %v642 = vadd.f32 0.0, %v641
          %643 = vdwg.mxu0
          %v644 = vpack.c.bf16 %v490, %v486
          %v645 = vpack.c.bf16 %v492, %v488
          %v646 = vpack.c.bf16 %v500, %v496
          %v647 = vpack.c.bf16 %v502, %v498
          %v648 = vpack.c.bf16 %v510, %v506
          %v649 = vpack.c.bf16 %v512, %v508
          %v650 = vpack.c.bf16 %v520, %v516
          %v651 = vpack.c.bf16 %v522, %v518
          %v652 = vpack.c.bf16 %v530, %v526
          %v653 = vpack.c.bf16 %v532, %v528
          %v654 = vpack.c.bf16 %v540, %v536
          %v655 = vpack.c.bf16 %v542, %v538
          %v656 = vpack.c.bf16 %v550, %v546
          %v657 = vpack.c.bf16 %v552, %v548
          %v658 = vpack.c.bf16 %v560, %v556
          %v659 = vpack.c.bf16 %v562, %v558
          %v660 = vpack.c.bf16 %v570, %v566
          %v661 = vpack.c.bf16 %v572, %v568
          %v662 = vpack.c.bf16 %v580, %v576
          %v663 = vpack.c.bf16 %v582, %v578
          %v664 = vpack.c.bf16 %v590, %v586
          %v665 = vpack.c.bf16 %v592, %v588
          %v666 = vpack.c.bf16 %v600, %v596
          %v667 = vpack.c.bf16 %v602, %v598
          %v668 = vpack.c.bf16 %v610, %v606
          %v669 = vpack.c.bf16 %v612, %v608
          %v670 = vpack.c.bf16 %v620, %v616
          %v671 = vpack.c.bf16 %v622, %v618
          %v672 = vpack.c.bf16 %v630, %v626
          %v673 = vpack.c.bf16 %v632, %v628
          %v674 = vpack.c.bf16 %v640, %v636
          %v675 = vpack.c.bf16 %v642, %v638
          %676 = vst [vmem:[#allocation2] sm:$0xff] %v644
          %677 = vst [vmem:[#allocation2 + $0x8] sm:$0xff] %v645
          %678 = vst [vmem:[#allocation2 + $0x10] sm:$0xff] %v646
          %679 = vst [vmem:[#allocation2 + $0x18] sm:$0xff] %v647
          %680 = vst [vmem:[#allocation2 + $0x20] sm:$0xff] %v648
          %681 = vst [vmem:[#allocation2 + $0x28] sm:$0xff] %v649
          %682 = vst [vmem:[#allocation2 + $0x30] sm:$0xff] %v650
          %683 = vst [vmem:[#allocation2 + $0x38] sm:$0xff] %v651
          %684 = vst [vmem:[#allocation2 + $0x40] sm:$0xff] %v652
          %685 = vst [vmem:[#allocation2 + $0x48] sm:$0xff] %v653
          %686 = vst [vmem:[#allocation2 + $0x50] sm:$0xff] %v654
          %687 = vst [vmem:[#allocation2 + $0x58] sm:$0xff] %v655
          %688 = vst [vmem:[#allocation2 + $0x60] sm:$0xff] %v656
          %689 = vst [vmem:[#allocation2 + $0x68] sm:$0xff] %v657
          %690 = vst [vmem:[#allocation2 + $0x70] sm:$0xff] %v658
          %691 = vst [vmem:[#allocation2 + $0x78] sm:$0xff] %v659
          %692 = vst [vmem:[#allocation2 + $0x80] sm:$0xff] %v660
          %693 = vst [vmem:[#allocation2 + $0x88] sm:$0xff] %v661
          %694 = vst [vmem:[#allocation2 + $0x90] sm:$0xff] %v662
          %695 = vst [vmem:[#allocation2 + $0x98] sm:$0xff] %v663
          %696 = vst [vmem:[#allocation2 + $0xa0] sm:$0xff] %v664
          %697 = vst [vmem:[#allocation2 + $0xa8] sm:$0xff] %v665
          %698 = vst [vmem:[#allocation2 + $0xb0] sm:$0xff] %v666
          %699 = vst [vmem:[#allocation2 + $0xb8] sm:$0xff] %v667
          %700 = vst [vmem:[#allocation2 + $0xc0] sm:$0xff] %v668
          %701 = vst [vmem:[#allocation2 + $0xc8] sm:$0xff] %v669
          %702 = vst [vmem:[#allocation2 + $0xd0] sm:$0xff] %v670
          %703 = vst [vmem:[#allocation2 + $0xd8] sm:$0xff] %v671
          %704 = vst [vmem:[#allocation2 + $0xe0] sm:$0xff] %v672
          %705 = vst [vmem:[#allocation2 + $0xe8] sm:$0xff] %v673
          %706 = vst [vmem:[#allocation2 + $0xf0] sm:$0xff] %v674
          %707 = vst [vmem:[#allocation2 + $0xf8] sm:$0xff] %v675
        $region44: #{tpu_custom_call.1} parent=39 // pred_fallthru
          _
        %v708 = vld [vmem:[%s2] sm:$0xf]
        %v709 = vld [vmem:[%s2 + $0x4] sm:$0xf]
        %v710 = vld [vmem:[%s2 + $0x8] sm:$0xf]
        %v711 = vld [vmem:[%s2 + $0xc] sm:$0xf]
        %v712 = vld [vmem:[%s2 + $0x10] sm:$0xf]
        %v713 = vld [vmem:[%s2 + $0x14] sm:$0xf]
        %v714 = vld [vmem:[%s2 + $0x18] sm:$0xf]
        %v715 = vld [vmem:[%s2 + $0x1c] sm:$0xf]
        %v716 = vld [vmem:[%s2 + $0x20] sm:$0xf]
        %v717 = vld [vmem:[%s2 + $0x24] sm:$0xf]
        %v718 = vld [vmem:[%s2 + $0x28] sm:$0xf]
        %v719 = vld [vmem:[%s2 + $0x2c] sm:$0xf]
        %v720 = vld [vmem:[%s2 + $0x30] sm:$0xf]
        %v721 = vld [vmem:[%s2 + $0x34] sm:$0xf]
        %v722 = vld [vmem:[%s2 + $0x38] sm:$0xf]
        %v723 = vld [vmem:[%s2 + $0x3c] sm:$0xf]
        %v724 = vld [vmem:[%s267] sm:$0x3]
        %v741 = vunpack.c.l.b16 %v708
        %v742 = vunpack.c.l.b16 %v709
        %v743 = vunpack.c.l.b16 %v710
        %v744 = vunpack.c.l.b16 %v711
        %v745 = vunpack.c.l.b16 %v712
        %v746 = vunpack.c.l.b16 %v713
        %v747 = vunpack.c.l.b16 %v714
        %v748 = vunpack.c.l.b16 %v715
        %v749 = vunpack.c.l.b16 %v716
        %v750 = vunpack.c.l.b16 %v717
        %v751 = vunpack.c.l.b16 %v718
        %v752 = vunpack.c.l.b16 %v719
        %v753 = vunpack.c.l.b16 %v720
        %v754 = vunpack.c.l.b16 %v721
        %v755 = vunpack.c.l.b16 %v722
        %v756 = vunpack.c.l.b16 %v723
        %v757 = vpack.c.b16 %v742, %v741
        %v758 = vpack.c.b16 %v744, %v743
        %v759 = vpack.c.b16 %v746, %v745
        %v760 = vpack.c.b16 %v748, %v747
        %v761 = vpack.c.b16 %v750, %v749
        %v762 = vpack.c.b16 %v752, %v751
        %v763 = vpack.c.b16 %v754, %v753
        %v764 = vpack.c.b16 %v756, %v755
        %vm765 = vcmask 31744
        %v767 = vsel %vm765, %v757, 0
        %v770 = vsel %vm765, %v758, 0
        %v773 = vsel %vm765, %v759, 0
        %v776 = vsel %vm765, %v760, 0
        %v779 = vsel %vm765, %v761, 0
        %v782 = vsel %vm765, %v762, 0
        %v785 = vsel %vm765, %v763, 0
        %v788 = vsel %vm765, %v764, 0
        %vm790 = vcmask 1041408
        %v792 = vsel %vm790, %v724, 0
        %794 = vmatprep.subr.bf16.mxu0 0
        %795 = vmatpush1.bf16.msra.mxu0 %v792
        %796 = vmatprep.subr.bf16.mxu0 0
        %797 = vmatpush1.bf16.msra.mxu0 0
        %798 = vmatprep.subr.bf16.mxu0 0
        %799 = vmatpush1.bf16.msra.mxu0 0
        %800 = vmatprep.subr.bf16.mxu0 0
        %801 = vmatpush1.bf16.msra.mxu0 0
        %802 = vmatprep.subr.bf16.mxu0 0
        %803 = vmatpush1.bf16.msra.mxu0 0
        %804 = vmatprep.subr.bf16.mxu0 0
        %805 = vmatpush1.bf16.msra.mxu0 0
        %806 = vmatprep.subr.bf16.mxu0 0
        %807 = vmatpush1.bf16.msra.mxu0 0
        %808 = vmatprep.subr.bf16.mxu0 0
        %809 = vmatpush1.bf16.msra.mxu0 0
        %810 = vmatprep.subr.bf16.mxu0 0
        %811 = vmatpush1.bf16.msra.mxu0 0
        %812 = vmatprep.subr.bf16.mxu0 0
        %813 = vmatpush1.bf16.msra.mxu0 0
        %814 = vmatprep.subr.bf16.mxu0 0
        %815 = vmatpush1.bf16.msra.mxu0 0
        %816 = vmatprep.subr.bf16.mxu0 0
        %817 = vmatpush1.bf16.msra.mxu0 0
        %818 = vmatprep.subr.bf16.mxu0 0
        %819 = vmatpush1.bf16.msra.mxu0 0
        %820 = vmatprep.subr.bf16.mxu0 0
        %821 = vmatpush1.bf16.msra.mxu0 0
        %822 = vmatprep.subr.bf16.mxu0 0
        %823 = vmatpush1.bf16.msra.mxu0 0
        %824 = vmatprep.subr.bf16.mxu0 0
        %825 = vmatpush1.bf16.msra.mxu0 0
        %826 = vmatprep.mubr.bf16.mxu0 0
        %827 = vmatmul.mubr.bf16.gmra.mrb[0].mxu0 %v767
        %v828 = vpop.f32.mrb[0].mxu0
        %v829 = vadd.f32 0.0, %v828
        %v830 = vpop.f32.mrb[0].mxu0
        %v831 = vpop.f32.mrb[0].mxu0
        %v832 = vadd.f32 0.0, %v831
        %v833 = vpop.f32.mrb[0].mxu0
        %834 = vmatprep.mubr.bf16.mxu0 0
        %835 = vmatmul.mubr.bf16.gmra.mrb[0].mxu0 %v770
        %v836 = vpop.f32.mrb[0].mxu0
        %v837 = vadd.f32 0.0, %v836
        %v838 = vpop.f32.mrb[0].mxu0
        %v839 = vpop.f32.mrb[0].mxu0
        %v840 = vadd.f32 0.0, %v839
        %v841 = vpop.f32.mrb[0].mxu0
        %842 = vmatprep.mubr.bf16.mxu0 0
        %843 = vmatmul.mubr.bf16.gmra.mrb[0].mxu0 %v773
        %v844 = vpop.f32.mrb[0].mxu0
        %v845 = vadd.f32 0.0, %v844
        %v846 = vpop.f32.mrb[0].mxu0
        %v847 = vpop.f32.mrb[0].mxu0
        %v848 = vadd.f32 0.0, %v847
        %v849 = vpop.f32.mrb[0].mxu0
        %850 = vmatprep.mubr.bf16.mxu0 0
        %851 = vmatmul.mubr.bf16.gmra.mrb[0].mxu0 %v776
        %v852 = vpop.f32.mrb[0].mxu0
        %v853 = vadd.f32 0.0, %v852
        %v854 = vpop.f32.mrb[0].mxu0
        %v855 = vpop.f32.mrb[0].mxu0
        %v856 = vadd.f32 0.0, %v855
        %v857 = vpop.f32.mrb[0].mxu0
        %858 = vmatprep.mubr.bf16.mxu0 0
        %859 = vmatmul.mubr.bf16.gmra.mrb[0].mxu0 %v779
        %v860 = vpop.f32.mrb[0].mxu0
        %v861 = vadd.f32 0.0, %v860
        %v862 = vpop.f32.mrb[0].mxu0
        %v863 = vpop.f32.mrb[0].mxu0
        %v864 = vadd.f32 0.0, %v863
        %v865 = vpop.f32.mrb[0].mxu0
        %866 = vmatprep.mubr.bf16.mxu0 0
        %867 = vmatmul.mubr.bf16.gmra.mrb[0].mxu0 %v782
        %v868 = vpop.f32.mrb[0].mxu0
        %v869 = vadd.f32 0.0, %v868
        %v870 = vpop.f32.mrb[0].mxu0
        %v871 = vpop.f32.mrb[0].mxu0
        %v872 = vadd.f32 0.0, %v871
        %v873 = vpop.f32.mrb[0].mxu0
        %874 = vmatprep.mubr.bf16.mxu0 0
        %875 = vmatmul.mubr.bf16.gmra.mrb[0].mxu0 %v785
        %v876 = vpop.f32.mrb[0].mxu0
        %v877 = vadd.f32 0.0, %v876
        %v878 = vpop.f32.mrb[0].mxu0
        %v879 = vpop.f32.mrb[0].mxu0
        %v880 = vadd.f32 0.0, %v879
        %v881 = vpop.f32.mrb[0].mxu0
        %882 = vmatprep.mubr.bf16.mxu0 0
        %883 = vmatmul.mubr.bf16.gmra.mrb[0].mxu0 %v788
        %v884 = vpop.f32.mrb[0].mxu0
        %v885 = vadd.f32 0.0, %v884
        %v886 = vpop.f32.mrb[0].mxu0
        %v887 = vpop.f32.mrb[0].mxu0
        %v888 = vadd.f32 0.0, %v887
        %v889 = vpop.f32.mrb[0].mxu0
        %890 = vdwg.mxu0
        %v891 = vpack.c.bf16 %v832, %v829
        %v892 = vpack.c.bf16 %v840, %v837
        %v893 = vpack.c.bf16 %v848, %v845
        %v894 = vpack.c.bf16 %v856, %v853
        %v895 = vpack.c.bf16 %v864, %v861
        %v896 = vpack.c.bf16 %v872, %v869
        %v897 = vpack.c.bf16 %v880, %v877
        %v898 = vpack.c.bf16 %v888, %v885
        %v899 = vld [vmem:[#allocation2] sm:$0xff]
        %v900 = vld [vmem:[#allocation2 + $0x8] sm:$0xff]
        %v901 = vld [vmem:[#allocation2 + $0x10] sm:$0xff]
        %v902 = vld [vmem:[#allocation2 + $0x18] sm:$0xff]
        %v903 = vld [vmem:[#allocation2 + $0x80] sm:$0xff]
        %v904 = vld [vmem:[#allocation2 + $0x88] sm:$0xff]
        %v905 = vld [vmem:[#allocation2 + $0x90] sm:$0xff]
        %v906 = vld [vmem:[#allocation2 + $0x98] sm:$0xff]
        %907 = vxpose.xlu0.c.b16.start [1/8] %v899, 128
        %908 = vxpose.xlu0.c.b16.cont [2/8] %v901, 128
        %909 = vxpose.xlu0.c.b16.cont [3/8] 0, 128
        %910 = vxpose.xlu0.c.b16.cont [4/8] 0, 128
        %911 = vxpose.xlu0.c.b16.cont [5/8] 0, 128
        %912 = vxpose.xlu0.c.b16.cont [6/8] 0, 128
        %913 = vxpose.xlu0.c.b16.cont [7/8] 0, 128
        %914 = vxpose.xlu0.c.b16.end [8/8] 0, 128
        %v915 = vpop.trf.xlu0
        %v916 = vpop.trf.xlu0
        %v917 = vpop.trf.xlu0
        %v918 = vpop.trf.xlu0
        %v919 = vpop.trf.xlu0
        %v920 = vpop.trf.xlu0
        %v921 = vpop.trf.xlu0
        %v922 = vpop.trf.xlu0
        %923 = vxpose.xlu0.c.b16.start [1/8] %v900, 128
        %924 = vxpose.xlu0.c.b16.cont [2/8] %v902, 128
        %925 = vxpose.xlu0.c.b16.cont [3/8] 0, 128
        %926 = vxpose.xlu0.c.b16.cont [4/8] 0, 128
        %927 = vxpose.xlu0.c.b16.cont [5/8] 0, 128
        %928 = vxpose.xlu0.c.b16.cont [6/8] 0, 128
        %929 = vxpose.xlu0.c.b16.cont [7/8] 0, 128
        %930 = vxpose.xlu0.c.b16.end [8/8] 0, 128
        %v931 = vpop.trf.xlu0
        %v932 = vpop.trf.xlu0
        %v933 = vpop.trf.xlu0
        %v934 = vpop.trf.xlu0
        %v935 = vpop.trf.xlu0
        %v936 = vpop.trf.xlu0
        %v937 = vpop.trf.xlu0
        %v938 = vpop.trf.xlu0
        %vm939 = vcmask 261120
        %v941 = vsel %vm939, %v915, 0
        %v944 = vsel %vm939, %v916, 0
        %v947 = vsel %vm939, %v917, 0
        %v950 = vsel %vm939, %v918, 0
        %v953 = vsel %vm939, %v919, 0
        %v956 = vsel %vm939, %v920, 0
        %v959 = vsel %vm939, %v921, 0
        %v962 = vsel %vm939, %v922, 0
        %v965 = vsel %vm939, %v931, 0
        %v968 = vsel %vm939, %v932, 0
        %v971 = vsel %vm939, %v933, 0
        %v974 = vsel %vm939, %v934, 0
        %v977 = vsel %vm939, %v935, 0
        %v980 = vsel %vm939, %v936, 0
        %v983 = vsel %vm939, %v937, 0
        %v986 = vsel %vm939, %v938, 0
        %988 = vmatprep.subr.bf16.mxu0 0
        %989 = vmatpush1.bf16.msra.mxu0 %v891
        %990 = vmatprep.subr.bf16.mxu0 0
        %991 = vmatpush1.bf16.msra.mxu0 %v892
        %992 = vmatprep.subr.bf16.mxu0 0
        %993 = vmatpush1.bf16.msra.mxu0 0
        %994 = vmatprep.subr.bf16.mxu0 0
        %995 = vmatpush1.bf16.msra.mxu0 0
        %996 = vmatprep.subr.bf16.mxu0 0
        %997 = vmatpush1.bf16.msra.mxu0 0
        %998 = vmatprep.subr.bf16.mxu0 0
        %999 = vmatpush1.bf16.msra.mxu0 0
        %1000 = vmatprep.subr.bf16.mxu0 0
        %1001 = vmatpush1.bf16.msra.mxu0 0
        %1002 = vmatprep.subr.bf16.mxu0 0
        %1003 = vmatpush1.bf16.msra.mxu0 0
        %1004 = vmatprep.subr.bf16.mxu0 0
        %1005 = vmatpush1.bf16.msra.mxu0 0
        %1006 = vmatprep.subr.bf16.mxu0 0
        %1007 = vmatpush1.bf16.msra.mxu0 0
        %1008 = vmatprep.subr.bf16.mxu0 0
        %1009 = vmatpush1.bf16.msra.mxu0 0
        %1010 = vmatprep.subr.bf16.mxu0 0
        %1011 = vmatpush1.bf16.msra.mxu0 0
        %1012 = vmatprep.subr.bf16.mxu0 0
        %1013 = vmatpush1.bf16.msra.mxu0 0
        %1014 = vmatprep.subr.bf16.mxu0 0
        %1015 = vmatpush1.bf16.msra.mxu0 0
        %1016 = vmatprep.subr.bf16.mxu0 0
        %1017 = vmatpush1.bf16.msra.mxu0 0
        %1018 = vmatprep.subr.bf16.mxu0 0
        %1019 = vmatpush1.bf16.msra.mxu0 0
        %1020 = vmatprep.mubr.bf16.mxu0 0
        %1021 = vmatmul.mubr.bf16.gmra.mrb[0].mxu0 %v941
        %v1022 = vpop.f32.mrb[0].mxu0
        %v1023 = vadd.f32 0.0, %v1022
        %v1024 = vpop.f32.mrb[0].mxu0
        %v1025 = vpop.f32.mrb[0].mxu0
        %v1026 = vadd.f32 0.0, %v1025
        %v1027 = vpop.f32.mrb[0].mxu0
        %1028 = vmatprep.mubr.bf16.mxu0 0
        %1029 = vmatmul.mubr.bf16.gmra.mrb[0].mxu0 %v944
        %v1030 = vpop.f32.mrb[0].mxu0
        %v1031 = vadd.f32 0.0, %v1030
        %v1032 = vpop.f32.mrb[0].mxu0
        %v1033 = vpop.f32.mrb[0].mxu0
        %v1034 = vadd.f32 0.0, %v1033
        %v1035 = vpop.f32.mrb[0].mxu0
        %1036 = vmatprep.mubr.bf16.mxu0 0
        %1037 = vmatmul.mubr.bf16.gmra.mrb[0].mxu0 %v947
        %v1038 = vpop.f32.mrb[0].mxu0
        %v1039 = vadd.f32 0.0, %v1038
        %v1040 = vpop.f32.mrb[0].mxu0
        %v1041 = vpop.f32.mrb[0].mxu0
        %v1042 = vadd.f32 0.0, %v1041
        %v1043 = vpop.f32.mrb[0].mxu0
        %1044 = vmatprep.mubr.bf16.mxu0 0
        %1045 = vmatmul.mubr.bf16.gmra.mrb[0].mxu0 %v950
        %v1046 = vpop.f32.mrb[0].mxu0
        %v1047 = vadd.f32 0.0, %v1046
        %v1048 = vpop.f32.mrb[0].mxu0
        %v1049 = vpop.f32.mrb[0].mxu0
        %v1050 = vadd.f32 0.0, %v1049
        %v1051 = vpop.f32.mrb[0].mxu0
        %1052 = vmatprep.mubr.bf16.mxu0 0
        %1053 = vmatmul.mubr.bf16.gmra.mrb[0].mxu0 %v953
        %v1054 = vpop.f32.mrb[0].mxu0
        %v1055 = vadd.f32 0.0, %v1054
        %v1056 = vpop.f32.mrb[0].mxu0
        %v1057 = vpop.f32.mrb[0].mxu0
        %v1058 = vadd.f32 0.0, %v1057
        %v1059 = vpop.f32.mrb[0].mxu0
        %1060 = vmatprep.mubr.bf16.mxu0 0
        %1061 = vmatmul.mubr.bf16.gmra.mrb[0].mxu0 %v956
        %v1062 = vpop.f32.mrb[0].mxu0
        %v1063 = vadd.f32 0.0, %v1062
        %v1064 = vpop.f32.mrb[0].mxu0
        %v1065 = vpop.f32.mrb[0].mxu0
        %v1066 = vadd.f32 0.0, %v1065
        %v1067 = vpop.f32.mrb[0].mxu0
        %1068 = vmatprep.mubr.bf16.mxu0 0
        %1069 = vmatmul.mubr.bf16.gmra.mrb[0].mxu0 %v959
        %v1070 = vpop.f32.mrb[0].mxu0
        %v1071 = vadd.f32 0.0, %v1070
        %v1072 = vpop.f32.mrb[0].mxu0
        %v1073 = vpop.f32.mrb[0].mxu0
        %v1074 = vadd.f32 0.0, %v1073
        %v1075 = vpop.f32.mrb[0].mxu0
        %1076 = vmatprep.mubr.bf16.mxu0 0
        %1077 = vmatmul.mubr.bf16.gmra.mrb[0].mxu0 %v962
        %v1078 = vpop.f32.mrb[0].mxu0
        %v1079 = vadd.f32 0.0, %v1078
        %v1080 = vpop.f32.mrb[0].mxu0
        %v1081 = vpop.f32.mrb[0].mxu0
        %v1082 = vadd.f32 0.0, %v1081
        %v1083 = vpop.f32.mrb[0].mxu0
        %1084 = vmatprep.mubr.bf16.mxu0 0
        %1085 = vmatmul.mubr.bf16.gmra.mrb[0].mxu0 %v965
        %v1086 = vpop.f32.mrb[0].mxu0
        %v1087 = vadd.f32 0.0, %v1086
        %v1088 = vpop.f32.mrb[0].mxu0
        %v1089 = vpop.f32.mrb[0].mxu0
        %v1090 = vadd.f32 0.0, %v1089
        %v1091 = vpop.f32.mrb[0].mxu0
        %1092 = vmatprep.mubr.bf16.mxu0 0
        %1093 = vmatmul.mubr.bf16.gmra.mrb[0].mxu0 %v968
        %v1094 = vpop.f32.mrb[0].mxu0
        %v1095 = vadd.f32 0.0, %v1094
        %v1096 = vpop.f32.mrb[0].mxu0
        %v1097 = vpop.f32.mrb[0].mxu0
        %v1098 = vadd.f32 0.0, %v1097
        %v1099 = vpop.f32.mrb[0].mxu0
        %1100 = vmatprep.mubr.bf16.mxu0 0
        %1101 = vmatmul.mubr.bf16.gmra.mrb[0].mxu0 %v971
        %v1102 = vpop.f32.mrb[0].mxu0
        %v1103 = vadd.f32 0.0, %v1102
        %v1104 = vpop.f32.mrb[0].mxu0
        %v1105 = vpop.f32.mrb[0].mxu0
        %v1106 = vadd.f32 0.0, %v1105
        %v1107 = vpop.f32.mrb[0].mxu0
        %1108 = vmatprep.mubr.bf16.mxu0 0
        %1109 = vmatmul.mubr.bf16.gmra.mrb[0].mxu0 %v974
        %v1110 = vpop.f32.mrb[0].mxu0
        %v1111 = vadd.f32 0.0, %v1110
        %v1112 = vpop.f32.mrb[0].mxu0
        %v1113 = vpop.f32.mrb[0].mxu0
        %v1114 = vadd.f32 0.0, %v1113
        %v1115 = vpop.f32.mrb[0].mxu0
        %1116 = vmatprep.mubr.bf16.mxu0 0
        %1117 = vmatmul.mubr.bf16.gmra.mrb[0].mxu0 %v977
        %v1118 = vpop.f32.mrb[0].mxu0
        %v1119 = vadd.f32 0.0, %v1118
        %v1120 = vpop.f32.mrb[0].mxu0
        %v1121 = vpop.f32.mrb[0].mxu0
        %v1122 = vadd.f32 0.0, %v1121
        %v1123 = vpop.f32.mrb[0].mxu0
        %1124 = vmatprep.mubr.bf16.mxu0 0
        %1125 = vmatmul.mubr.bf16.gmra.mrb[0].mxu0 %v980
        %v1126 = vpop.f32.mrb[0].mxu0
        %v1127 = vadd.f32 0.0, %v1126
        %v1128 = vpop.f32.mrb[0].mxu0
        %v1129 = vpop.f32.mrb[0].mxu0
        %v1130 = vadd.f32 0.0, %v1129
        %v1131 = vpop.f32.mrb[0].mxu0
        %1132 = vmatprep.mubr.bf16.mxu0 0
        %1133 = vmatmul.mubr.bf16.gmra.mrb[0].mxu0 %v983
        %v1134 = vpop.f32.mrb[0].mxu0
        %v1135 = vadd.f32 0.0, %v1134
        %v1136 = vpop.f32.mrb[0].mxu0
        %v1137 = vpop.f32.mrb[0].mxu0
        %v1138 = vadd.f32 0.0, %v1137
        %v1139 = vpop.f32.mrb[0].mxu0
        %1140 = vmatprep.mubr.bf16.mxu0 0
        %1141 = vmatmul.mubr.bf16.gmra.mrb[0].mxu0 %v986
        %v1142 = vpop.f32.mrb[0].mxu0
        %v1143 = vadd.f32 0.0, %v1142
        %v1144 = vpop.f32.mrb[0].mxu0
        %v1145 = vpop.f32.mrb[0].mxu0
        %v1146 = vadd.f32 0.0, %v1145
        %v1147 = vpop.f32.mrb[0].mxu0
        %1148 = vdwg.mxu0
        %v1149 = vmax.f32 %v1023, %v1039
        %v1150 = vmax.f32 %v1026, %v1042
        %v1151 = vmax.f32 %v1031, %v1047
        %v1152 = vmax.f32 %v1034, %v1050
        %v1153 = vmax.f32 %v1149, %v1055
        %v1154 = vmax.f32 %v1150, %v1058
        %v1155 = vmax.f32 %v1151, %v1063
        %v1156 = vmax.f32 %v1152, %v1066
        %v1157 = vmax.f32 %v1153, %v1071
        %v1158 = vmax.f32 %v1154, %v1074
        %v1159 = vmax.f32 %v1155, %v1079
        %v1160 = vmax.f32 %v1156, %v1082
        %v1161 = vmax.f32 %v1157, %v1087
        %v1162 = vmax.f32 %v1158, %v1090
        %v1163 = vmax.f32 %v1159, %v1095
        %v1164 = vmax.f32 %v1160, %v1098
        %v1165 = vmax.f32 %v1161, %v1103
        %v1166 = vmax.f32 %v1162, %v1106
        %v1167 = vmax.f32 %v1163, %v1111
        %v1168 = vmax.f32 %v1164, %v1114
        %v1169 = vmax.f32 %v1165, %v1119
        %v1170 = vmax.f32 %v1166, %v1122
        %v1171 = vmax.f32 %v1167, %v1127
        %v1172 = vmax.f32 %v1168, %v1130
        %v1173 = vmax.f32 %v1169, %v1135
        %v1174 = vmax.f32 %v1170, %v1138
        %v1175 = vmax.f32 %v1171, %v1143
        %v1176 = vmax.f32 %v1172, %v1146
        %v1177 = vmax.f32 %v1173, %v1174
        %v1178 = vmax.f32 %v1175, %v1176
        %v1179 = vmax.f32 %v1177, %v1178
        %v1180 = vrot.slane %v1179, 4
        %v1181 = vmax.f32 %v1179, %v1180
        %v1182 = vrot.slane %v1181, 2
        %v1183 = vmax.f32 %v1181, %v1182
        %v1184 = vrot.slane %v1183, 1
        %v1185 = vmax.f32 %v1183, %v1184
        %v1186 = vsub.f32 %v1023, %v1185
        %v1187 = vsub.f32 %v1026, %v1185
        %v1188 = vsub.f32 %v1031, %v1185
        %v1189 = vsub.f32 %v1034, %v1185
        %v1190 = vsub.f32 %v1039, %v1185
        %v1191 = vsub.f32 %v1042, %v1185
        %v1192 = vsub.f32 %v1047, %v1185
        %v1193 = vsub.f32 %v1050, %v1185
        %v1194 = vsub.f32 %v1055, %v1185
        %v1195 = vsub.f32 %v1058, %v1185
        %v1196 = vsub.f32 %v1063, %v1185
        %v1197 = vsub.f32 %v1066, %v1185
        %v1198 = vsub.f32 %v1071, %v1185
        %v1199 = vsub.f32 %v1074, %v1185
        %v1200 = vsub.f32 %v1079, %v1185
        %v1201 = vsub.f32 %v1082, %v1185
        %v1202 = vsub.f32 %v1087, %v1185
        %v1203 = vsub.f32 %v1090, %v1185
        %v1204 = vsub.f32 %v1095, %v1185
        %v1205 = vsub.f32 %v1098, %v1185
        %v1206 = vsub.f32 %v1103, %v1185
        %v1207 = vsub.f32 %v1106, %v1185
        %v1208 = vsub.f32 %v1111, %v1185
        %v1209 = vsub.f32 %v1114, %v1185
        %v1210 = vsub.f32 %v1119, %v1185
        %v1211 = vsub.f32 %v1122, %v1185
        %v1212 = vsub.f32 %v1127, %v1185
        %v1213 = vsub.f32 %v1130, %v1185
        %v1214 = vsub.f32 %v1135, %v1185
        %v1215 = vsub.f32 %v1138, %v1185
        %v1216 = vsub.f32 %v1143, %v1185
        %v1217 = vsub.f32 %v1146, %v1185
        %v1218 = vmul.f32 %v1186, 1.442695
        %v1219 = vpow.pop %v1218
        %v1220 = vmul.f32 %v1187, 1.442695
        %v1221 = vpow.pop %v1220
        %v1222 = vmul.f32 %v1188, 1.442695
        %v1223 = vpow.pop %v1222
        %v1224 = vmul.f32 %v1189, 1.442695
        %v1225 = vpow.pop %v1224
        %v1226 = vmul.f32 %v1190, 1.442695
        %v1227 = vpow.pop %v1226
        %v1228 = vmul.f32 %v1191, 1.442695
        %v1229 = vpow.pop %v1228
        %v1230 = vmul.f32 %v1192, 1.442695
        %v1231 = vpow.pop %v1230
        %v1232 = vmul.f32 %v1193, 1.442695
        %v1233 = vpow.pop %v1232
        %v1234 = vmul.f32 %v1194, 1.442695
        %v1235 = vpow.pop %v1234
        %v1236 = vmul.f32 %v1195, 1.442695
        %v1237 = vpow.pop %v1236
        %v1238 = vmul.f32 %v1196, 1.442695
        %v1239 = vpow.pop %v1238
        %v1240 = vmul.f32 %v1197, 1.442695
        %v1241 = vpow.pop %v1240
        %v1242 = vmul.f32 %v1198, 1.442695
        %v1243 = vpow.pop %v1242
        %v1244 = vmul.f32 %v1199, 1.442695
        %v1245 = vpow.pop %v1244
        %v1246 = vmul.f32 %v1200, 1.442695
        %v1247 = vpow.pop %v1246
        %v1248 = vmul.f32 %v1201, 1.442695
        %v1249 = vpow.pop %v1248
        %v1250 = vmul.f32 %v1202, 1.442695
        %v1251 = vpow.pop %v1250
        %v1252 = vmul.f32 %v1203, 1.442695
        %v1253 = vpow.pop %v1252
        %v1254 = vmul.f32 %v1204, 1.442695
        %v1255 = vpow.pop %v1254
        %v1256 = vmul.f32 %v1205, 1.442695
        %v1257 = vpow.pop %v1256
        %v1258 = vmul.f32 %v1206, 1.442695
        %v1259 = vpow.pop %v1258
        %v1260 = vmul.f32 %v1207, 1.442695
        %v1261 = vpow.pop %v1260
        %v1262 = vmul.f32 %v1208, 1.442695
        %v1263 = vpow.pop %v1262
        %v1264 = vmul.f32 %v1209, 1.442695
        %v1265 = vpow.pop %v1264
        %v1266 = vmul.f32 %v1210, 1.442695
        %v1267 = vpow.pop %v1266
        %v1268 = vmul.f32 %v1211, 1.442695
        %v1269 = vpow.pop %v1268
        %v1270 = vmul.f32 %v1212, 1.442695
        %v1271 = vpow.pop %v1270
        %v1272 = vmul.f32 %v1213, 1.442695
        %v1273 = vpow.pop %v1272
        %v1274 = vmul.f32 %v1214, 1.442695
        %v1275 = vpow.pop %v1274
        %v1276 = vmul.f32 %v1215, 1.442695
        %v1277 = vpow.pop %v1276
        %v1278 = vmul.f32 %v1216, 1.442695
        %v1279 = vpow.pop %v1278
        %v1280 = vmul.f32 %v1217, 1.442695
        %v1281 = vpow.pop %v1280
        %v1282 = vadd.f32 %v1219, %v1221
        %v1283 = vadd.f32 %v1282, %v1223
        %v1284 = vadd.f32 %v1283, %v1225
        %v1285 = vadd.f32 %v1284, %v1227
        %v1286 = vadd.f32 %v1285, %v1229
        %v1287 = vadd.f32 %v1286, %v1231
        %v1288 = vadd.f32 %v1287, %v1233
        %v1289 = vadd.f32 %v1288, %v1235
        %v1290 = vadd.f32 %v1289, %v1237
        %v1291 = vadd.f32 %v1290, %v1239
        %v1292 = vadd.f32 %v1291, %v1241
        %v1293 = vadd.f32 %v1292, %v1243
        %v1294 = vadd.f32 %v1293, %v1245
        %v1295 = vadd.f32 %v1294, %v1247
        %v1296 = vadd.f32 %v1295, %v1249
        %v1297 = vadd.f32 %v1296, %v1251
        %v1298 = vadd.f32 %v1297, %v1253
        %v1299 = vadd.f32 %v1298, %v1255
        %v1300 = vadd.f32 %v1299, %v1257
        %v1301 = vadd.f32 %v1300, %v1259
        %v1302 = vadd.f32 %v1301, %v1261
        %v1303 = vadd.f32 %v1302, %v1263
        %v1304 = vadd.f32 %v1303, %v1265
        %v1305 = vadd.f32 %v1304, %v1267
        %v1306 = vadd.f32 %v1305, %v1269
        %v1307 = vadd.f32 %v1306, %v1271
        %v1308 = vadd.f32 %v1307, %v1273
        %v1309 = vadd.f32 %v1308, %v1275
        %v1310 = vadd.f32 %v1309, %v1277
        %v1311 = vadd.f32 %v1310, %v1279
        %v1312 = vadd.f32 %v1311, %v1281
        %v1313 = vrot.slane %v1312, 4
        %v1314 = vadd.f32 %v1312, %v1313
        %v1315 = vrot.slane %v1314, 2
        %v1316 = vadd.f32 %v1314, %v1315
        %v1317 = vrot.slane %v1316, 1
        %v1318 = vadd.f32 %v1316, %v1317
        %v1319 = vpack.c.bf16 %v1221, %v1219
        %v1320 = vpack.c.bf16 %v1225, %v1223
        %v1321 = vpack.c.bf16 %v1229, %v1227
        %v1322 = vpack.c.bf16 %v1233, %v1231
        %v1323 = vpack.c.bf16 %v1237, %v1235
        %v1324 = vpack.c.bf16 %v1241, %v1239
        %v1325 = vpack.c.bf16 %v1245, %v1243
        %v1326 = vpack.c.bf16 %v1249, %v1247
        %v1327 = vpack.c.bf16 %v1253, %v1251
        %v1328 = vpack.c.bf16 %v1257, %v1255
        %v1329 = vpack.c.bf16 %v1261, %v1259
        %v1330 = vpack.c.bf16 %v1265, %v1263
        %v1331 = vpack.c.bf16 %v1269, %v1267
        %v1332 = vpack.c.bf16 %v1273, %v1271
        %v1333 = vpack.c.bf16 %v1277, %v1275
        %v1334 = vpack.c.bf16 %v1281, %v1279
        %1335 = vmatprep.subr.bf16.mxu0 0
        %1336 = vmatpush1.bf16.msra.mxu0 %v1319
        %1337 = vmatprep.subr.bf16.mxu0 0
        %1338 = vmatpush1.bf16.msra.mxu0 %v1320
        %1339 = vmatprep.subr.bf16.mxu0 0
        %1340 = vmatpush1.bf16.msra.mxu0 %v1321
        %1341 = vmatprep.subr.bf16.mxu0 0
        %1342 = vmatpush1.bf16.msra.mxu0 %v1322
        %1343 = vmatprep.subr.bf16.mxu0 0
        %1344 = vmatpush1.bf16.msra.mxu0 %v1323
        %1345 = vmatprep.subr.bf16.mxu0 0
        %1346 = vmatpush1.bf16.msra.mxu0 %v1324
        %1347 = vmatprep.subr.bf16.mxu0 0
        %1348 = vmatpush1.bf16.msra.mxu0 %v1325
        %1349 = vmatprep.subr.bf16.mxu0 0
        %1350 = vmatpush1.bf16.msra.mxu0 %v1326
        %1351 = vmatprep.subr.bf16.mxu0 0
        %1352 = vmatpush1.bf16.msra.mxu0 %v1327
        %1353 = vmatprep.subr.bf16.mxu0 0
        %1354 = vmatpush1.bf16.msra.mxu0 %v1328
        %1355 = vmatprep.subr.bf16.mxu0 0
        %1356 = vmatpush1.bf16.msra.mxu0 %v1329
        %1357 = vmatprep.subr.bf16.mxu0 0
        %1358 = vmatpush1.bf16.msra.mxu0 %v1330
        %1359 = vmatprep.subr.bf16.mxu0 0
        %1360 = vmatpush1.bf16.msra.mxu0 %v1331
        %1361 = vmatprep.subr.bf16.mxu0 0
        %1362 = vmatpush1.bf16.msra.mxu0 %v1332
        %1363 = vmatprep.subr.bf16.mxu0 0
        %1364 = vmatpush1.bf16.msra.mxu0 %v1333
        %1365 = vmatprep.subr.bf16.mxu0 0
        %1366 = vmatpush1.bf16.msra.mxu0 %v1334
        %1367 = vmatprep.mubr.bf16.mxu0 %v904
        %1368 = vmatmul.mubr.bf16.gmra.mrb[0].mxu0 %v903
        %v1369 = vpop.f32.mrb[0].mxu0
        %v1370 = vadd.f32 0.0, %v1369
        %v1371 = vpop.f32.mrb[0].mxu0
        %v1372 = vpop.f32.mrb[0].mxu0
        %v1373 = vadd.f32 0.0, %v1372
        %v1374 = vpop.f32.mrb[0].mxu0
        %1375 = vmatprep.mubr.bf16.mxu0 %v906
        %1376 = vmatmul.mubr.bf16.gmra.mrb[0].mxu0 %v905
        %v1377 = vpop.f32.mrb[0].mxu0
        %v1378 = vadd.f32 0.0, %v1377
        %v1379 = vpop.f32.mrb[0].mxu0
        %v1380 = vpop.f32.mrb[0].mxu0
        %v1381 = vadd.f32 0.0, %v1380
        %v1382 = vpop.f32.mrb[0].mxu0
        %1383 = vdwg.mxu0
        %v1384 = vrcp.pop %v1318
        %v1385 = vmul.f32 %v1370, %v1384
        %v1386 = vmul.f32 %v1373, %v1384
        %v1387 = vmul.f32 %v1378, %v1384
        %v1388 = vmul.f32 %v1381, %v1384
        %v1389 = vpack.c.bf16 %v1386, %v1385
        %v1390 = vpack.c.bf16 %v1388, %v1387
        %v1391 = vld [vmem:[#allocation2 + $0x20] sm:$0xff]
        %v1392 = vld [vmem:[#allocation2 + $0x28] sm:$0xff]
        %v1393 = vld [vmem:[#allocation2 + $0x30] sm:$0xff]
        %v1394 = vld [vmem:[#allocation2 + $0x38] sm:$0xff]
        %v1395 = vld [vmem:[#allocation2 + $0xa0] sm:$0xff]
        %v1396 = vld [vmem:[#allocation2 + $0xa8] sm:$0xff]
        %v1397 = vld [vmem:[#allocation2 + $0xb0] sm:$0xff]
        %v1398 = vld [vmem:[#allocation2 + $0xb8] sm:$0xff]
        %1399 = vxpose.xlu0.c.b16.start [1/8] %v1391, 128
        %1400 = vxpose.xlu0.c.b16.cont [2/8] %v1393, 128
        %1401 = vxpose.xlu0.c.b16.cont [3/8] 0, 128
        %1402 = vxpose.xlu0.c.b16.cont [4/8] 0, 128
        %1403 = vxpose.xlu0.c.b16.cont [5/8] 0, 128
        %1404 = vxpose.xlu0.c.b16.cont [6/8] 0, 128
        %1405 = vxpose.xlu0.c.b16.cont [7/8] 0, 128
        %1406 = vxpose.xlu0.c.b16.end [8/8] 0, 128
        %v1407 = vpop.trf.xlu0
        %v1408 = vpop.trf.xlu0
        %v1409 = vpop.trf.xlu0
        %v1410 = vpop.trf.xlu0
        %v1411 = vpop.trf.xlu0
        %v1412 = vpop.trf.xlu0
        %v1413 = vpop.trf.xlu0
        %v1414 = vpop.trf.xlu0
        %1415 = vxpose.xlu0.c.b16.start [1/8] %v1392, 128
        %1416 = vxpose.xlu0.c.b16.cont [2/8] %v1394, 128
        %1417 = vxpose.xlu0.c.b16.cont [3/8] 0, 128
        %1418 = vxpose.xlu0.c.b16.cont [4/8] 0, 128
        %1419 = vxpose.xlu0.c.b16.cont [5/8] 0, 128
        %1420 = vxpose.xlu0.c.b16.cont [6/8] 0, 128
        %1421 = vxpose.xlu0.c.b16.cont [7/8] 0, 128
        %1422 = vxpose.xlu0.c.b16.end [8/8] 0, 128
        %v1423 = vpop.trf.xlu0
        %v1424 = vpop.trf.xlu0
        %v1425 = vpop.trf.xlu0
        %v1426 = vpop.trf.xlu0
        %v1427 = vpop.trf.xlu0
        %v1428 = vpop.trf.xlu0
        %v1429 = vpop.trf.xlu0
        %v1430 = vpop.trf.xlu0
        %v1432 = vsel %vm939, %v1407, 0
        %v1435 = vsel %vm939, %v1408, 0
        %v1438 = vsel %vm939, %v1409, 0
        %v1441 = vsel %vm939, %v1410, 0
        %v1444 = vsel %vm939, %v1411, 0
        %v1447 = vsel %vm939, %v1412, 0
        %v1450 = vsel %vm939, %v1413, 0
        %v1453 = vsel %vm939, %v1414, 0
        %v1456 = vsel %vm939, %v1423, 0
        %v1459 = vsel %vm939, %v1424, 0
        %v1462 = vsel %vm939, %v1425, 0
        %v1465 = vsel %vm939, %v1426, 0
        %v1468 = vsel %vm939, %v1427, 0
        %v1471 = vsel %vm939, %v1428, 0
        %v1474 = vsel %vm939, %v1429, 0
        %v1477 = vsel %vm939, %v1430, 0
        %1479 = vmatprep.subr.bf16.mxu0 0
        %1480 = vmatpush1.bf16.msra.mxu0 %v893
        %1481 = vmatprep.subr.bf16.mxu0 0
        %1482 = vmatpush1.bf16.msra.mxu0 %v894
        %1483 = vmatprep.subr.bf16.mxu0 0
        %1484 = vmatpush1.bf16.msra.mxu0 0
        %1485 = vmatprep.subr.bf16.mxu0 0
        %1486 = vmatpush1.bf16.msra.mxu0 0
        %1487 = vmatprep.subr.bf16.mxu0 0
        %1488 = vmatpush1.bf16.msra.mxu0 0
        %1489 = vmatprep.subr.bf16.mxu0 0
        %1490 = vmatpush1.bf16.msra.mxu0 0
        %1491 = vmatprep.subr.bf16.mxu0 0
        %1492 = vmatpush1.bf16.msra.mxu0 0
        %1493 = vmatprep.subr.bf16.mxu0 0
        %1494 = vmatpush1.bf16.msra.mxu0 0
        %1495 = vmatprep.subr.bf16.mxu0 0
        %1496 = vmatpush1.bf16.msra.mxu0 0
        %1497 = vmatprep.subr.bf16.mxu0 0
        %1498 = vmatpush1.bf16.msra.mxu0 0
        %1499 = vmatprep.subr.bf16.mxu0 0
        %1500 = vmatpush1.bf16.msra.mxu0 0
        %1501 = vmatprep.subr.bf16.mxu0 0
        %1502 = vmatpush1.bf16.msra.mxu0 0
        %1503 = vmatprep.subr.bf16.mxu0 0
        %1504 = vmatpush1.bf16.msra.mxu0 0
        %1505 = vmatprep.subr.bf16.mxu0 0
        %1506 = vmatpush1.bf16.msra.mxu0 0
        %1507 = vmatprep.subr.bf16.mxu0 0
        %1508 = vmatpush1.bf16.msra.mxu0 0
        %1509 = vmatprep.subr.bf16.mxu0 0
        %1510 = vmatpush1.bf16.msra.mxu0 0
        %1511 = vmatprep.mubr.bf16.mxu0 0
        %1512 = vmatmul.mubr.bf16.gmra.mrb[0].mxu0 %v1432
        %v1513 = vpop.f32.mrb[0].mxu0
        %v1514 = vadd.f32 0.0, %v1513
        %v1515 = vpop.f32.mrb[0].mxu0
        %v1516 = vpop.f32.mrb[0].mxu0
        %v1517 = vadd.f32 0.0, %v1516
        %v1518 = vpop.f32.mrb[0].mxu0
        %1519 = vmatprep.mubr.bf16.mxu0 0
        %1520 = vmatmul.mubr.bf16.gmra.mrb[0].mxu0 %v1435
        %v1521 = vpop.f32.mrb[0].mxu0
        %v1522 = vadd.f32 0.0, %v1521
        %v1523 = vpop.f32.mrb[0].mxu0
        %v1524 = vpop.f32.mrb[0].mxu0
        %v1525 = vadd.f32 0.0, %v1524
        %v1526 = vpop.f32.mrb[0].mxu0
        %1527 = vmatprep.mubr.bf16.mxu0 0
        %1528 = vmatmul.mubr.bf16.gmra.mrb[0].mxu0 %v1438
        %v1529 = vpop.f32.mrb[0].mxu0
        %v1530 = vadd.f32 0.0, %v1529
        %v1531 = vpop.f32.mrb[0].mxu0
        %v1532 = vpop.f32.mrb[0].mxu0
        %v1533 = vadd.f32 0.0, %v1532
        %v1534 = vpop.f32.mrb[0].mxu0
        %1535 = vmatprep.mubr.bf16.mxu0 0
        %1536 = vmatmul.mubr.bf16.gmra.mrb[0].mxu0 %v1441
        %v1537 = vpop.f32.mrb[0].mxu0
        %v1538 = vadd.f32 0.0, %v1537
        %v1539 = vpop.f32.mrb[0].mxu0
        %v1540 = vpop.f32.mrb[0].mxu0
        %v1541 = vadd.f32 0.0, %v1540
        %v1542 = vpop.f32.mrb[0].mxu0
        %1543 = vmatprep.mubr.bf16.mxu0 0
        %1544 = vmatmul.mubr.bf16.gmra.mrb[0].mxu0 %v1444
        %v1545 = vpop.f32.mrb[0].mxu0
        %v1546 = vadd.f32 0.0, %v1545
        %v1547 = vpop.f32.mrb[0].mxu0
        %v1548 = vpop.f32.mrb[0].mxu0
        %v1549 = vadd.f32 0.0, %v1548
        %v1550 = vpop.f32.mrb[0].mxu0
        %1551 = vmatprep.mubr.bf16.mxu0 0
        %1552 = vmatmul.mubr.bf16.gmra.mrb[0].mxu0 %v1447
        %v1553 = vpop.f32.mrb[0].mxu0
        %v1554 = vadd.f32 0.0, %v1553
        %v1555 = vpop.f32.mrb[0].mxu0
        %v1556 = vpop.f32.mrb[0].mxu0
        %v1557 = vadd.f32 0.0, %v1556
        %v1558 = vpop.f32.mrb[0].mxu0
        %1559 = vmatprep.mubr.bf16.mxu0 0
        %1560 = vmatmul.mubr.bf16.gmra.mrb[0].mxu0 %v1450
        %v1561 = vpop.f32.mrb[0].mxu0
        %v1562 = vadd.f32 0.0, %v1561
        %v1563 = vpop.f32.mrb[0].mxu0
        %v1564 = vpop.f32.mrb[0].mxu0
        %v1565 = vadd.f32 0.0, %v1564
        %v1566 = vpop.f32.mrb[0].mxu0
        %1567 = vmatprep.mubr.bf16.mxu0 0
        %1568 = vmatmul.mubr.bf16.gmra.mrb[0].mxu0 %v1453
        %v1569 = vpop.f32.mrb[0].mxu0
        %v1570 = vadd.f32 0.0, %v1569
        %v1571 = vpop.f32.mrb[0].mxu0
        %v1572 = vpop.f32.mrb[0].mxu0
        %v1573 = vadd.f32 0.0, %v1572
        %v1574 = vpop.f32.mrb[0].mxu0
        %1575 = vmatprep.mubr.bf16.mxu0 0
        %1576 = vmatmul.mubr.bf16.gmra.mrb[0].mxu0 %v1456
        %v1577 = vpop.f32.mrb[0].mxu0
        %v1578 = vadd.f32 0.0, %v1577
        %v1579 = vpop.f32.mrb[0].mxu0
        %v1580 = vpop.f32.mrb[0].mxu0
        %v1581 = vadd.f32 0.0, %v1580
        %v1582 = vpop.f32.mrb[0].mxu0
        %1583 = vmatprep.mubr.bf16.mxu0 0
        %1584 = vmatmul.mubr.bf16.gmra.mrb[0].mxu0 %v1459
        %v1585 = vpop.f32.mrb[0].mxu0
        %v1586 = vadd.f32 0.0, %v1585
        %v1587 = vpop.f32.mrb[0].mxu0
        %v1588 = vpop.f32.mrb[0].mxu0
        %v1589 = vadd.f32 0.0, %v1588
        %v1590 = vpop.f32.mrb[0].mxu0
        %1591 = vmatprep.mubr.bf16.mxu0 0
        %1592 = vmatmul.mubr.bf16.gmra.mrb[0].mxu0 %v1462
        %v1593 = vpop.f32.mrb[0].mxu0
        %v1594 = vadd.f32 0.0, %v1593
        %v1595 = vpop.f32.mrb[0].mxu0
        %v1596 = vpop.f32.mrb[0].mxu0
        %v1597 = vadd.f32 0.0, %v1596
        %v1598 = vpop.f32.mrb[0].mxu0
        %1599 = vmatprep.mubr.bf16.mxu0 0
        %1600 = vmatmul.mubr.bf16.gmra.mrb[0].mxu0 %v1465
        %v1601 = vpop.f32.mrb[0].mxu0
        %v1602 = vadd.f32 0.0, %v1601
        %v1603 = vpop.f32.mrb[0].mxu0
        %v1604 = vpop.f32.mrb[0].mxu0
        %v1605 = vadd.f32 0.0, %v1604
        %v1606 = vpop.f32.mrb[0].mxu0
        %1607 = vmatprep.mubr.bf16.mxu0 0
        %1608 = vmatmul.mubr.bf16.gmra.mrb[0].mxu0 %v1468
        %v1609 = vpop.f32.mrb[0].mxu0
        %v1610 = vadd.f32 0.0, %v1609
        %v1611 = vpop.f32.mrb[0].mxu0
        %v1612 = vpop.f32.mrb[0].mxu0
        %v1613 = vadd.f32 0.0, %v1612
        %v1614 = vpop.f32.mrb[0].mxu0
        %1615 = vmatprep.mubr.bf16.mxu0 0
        %1616 = vmatmul.mubr.bf16.gmra.mrb[0].mxu0 %v1471
        %v1617 = vpop.f32.mrb[0].mxu0
        %v1618 = vadd.f32 0.0, %v1617
        %v1619 = vpop.f32.mrb[0].mxu0
        %v1620 = vpop.f32.mrb[0].mxu0
        %v1621 = vadd.f32 0.0, %v1620
        %v1622 = vpop.f32.mrb[0].mxu0
        %1623 = vmatprep.mubr.bf16.mxu0 0
        %1624 = vmatmul.mubr.bf16.gmra.mrb[0].mxu0 %v1474
        %v1625 = vpop.f32.mrb[0].mxu0
        %v1626 = vadd.f32 0.0, %v1625
        %v1627 = vpop.f32.mrb[0].mxu0
        %v1628 = vpop.f32.mrb[0].mxu0
        %v1629 = vadd.f32 0.0, %v1628
        %v1630 = vpop.f32.mrb[0].mxu0
        %1631 = vmatprep.mubr.bf16.mxu0 0
        %1632 = vmatmul.mubr.bf16.gmra.mrb[0].mxu0 %v1477
        %v1633 = vpop.f32.mrb[0].mxu0
        %v1634 = vadd.f32 0.0, %v1633
        %v1635 = vpop.f32.mrb[0].mxu0
        %v1636 = vpop.f32.mrb[0].mxu0
        %v1637 = vadd.f32 0.0, %v1636
        %v1638 = vpop.f32.mrb[0].mxu0
        %1639 = vdwg.mxu0
        %v1640 = vmax.f32 %v1514, %v1530
        %v1641 = vmax.f32 %v1517, %v1533
        %v1642 = vmax.f32 %v1522, %v1538
        %v1643 = vmax.f32 %v1525, %v1541
        %v1644 = vmax.f32 %v1640, %v1546
        %v1645 = vmax.f32 %v1641, %v1549
        %v1646 = vmax.f32 %v1642, %v1554
        %v1647 = vmax.f32 %v1643, %v1557
        %v1648 = vmax.f32 %v1644, %v1562
        %v1649 = vmax.f32 %v1645, %v1565
        %v1650 = vmax.f32 %v1646, %v1570
        %v1651 = vmax.f32 %v1647, %v1573
        %v1652 = vmax.f32 %v1648, %v1578
        %v1653 = vmax.f32 %v1649, %v1581
        %v1654 = vmax.f32 %v1650, %v1586
        %v1655 = vmax.f32 %v1651, %v1589
        %v1656 = vmax.f32 %v1652, %v1594
        %v1657 = vmax.f32 %v1653, %v1597
        %v1658 = vmax.f32 %v1654, %v1602
        %v1659 = vmax.f32 %v1655, %v1605
        %v1660 = vmax.f32 %v1656, %v1610
        %v1661 = vmax.f32 %v1657, %v1613
        %v1662 = vmax.f32 %v1658, %v1618
        %v1663 = vmax.f32 %v1659, %v1621
        %v1664 = vmax.f32 %v1660, %v1626
        %v1665 = vmax.f32 %v1661, %v1629
        %v1666 = vmax.f32 %v1662, %v1634
        %v1667 = vmax.f32 %v1663, %v1637
        %v1668 = vmax.f32 %v1664, %v1665
        %v1669 = vmax.f32 %v1666, %v1667
        %v1670 = vmax.f32 %v1668, %v1669
        %v1671 = vrot.slane %v1670, 4
        %v1672 = vmax.f32 %v1670, %v1671
        %v1673 = vrot.slane %v1672, 2
        %v1674 = vmax.f32 %v1672, %v1673
        %v1675 = vrot.slane %v1674, 1
        %v1676 = vmax.f32 %v1674, %v1675
        %v1677 = vsub.f32 %v1514, %v1676
        %v1678 = vsub.f32 %v1517, %v1676
        %v1679 = vsub.f32 %v1522, %v1676
        %v1680 = vsub.f32 %v1525, %v1676
        %v1681 = vsub.f32 %v1530, %v1676
        %v1682 = vsub.f32 %v1533, %v1676
        %v1683 = vsub.f32 %v1538, %v1676
        %v1684 = vsub.f32 %v1541, %v1676
        %v1685 = vsub.f32 %v1546, %v1676
        %v1686 = vsub.f32 %v1549, %v1676
        %v1687 = vsub.f32 %v1554, %v1676
        %v1688 = vsub.f32 %v1557, %v1676
        %v1689 = vsub.f32 %v1562, %v1676
        %v1690 = vsub.f32 %v1565, %v1676
        %v1691 = vsub.f32 %v1570, %v1676
        %v1692 = vsub.f32 %v1573, %v1676
        %v1693 = vsub.f32 %v1578, %v1676
        %v1694 = vsub.f32 %v1581, %v1676
        %v1695 = vsub.f32 %v1586, %v1676
        %v1696 = vsub.f32 %v1589, %v1676
        %v1697 = vsub.f32 %v1594, %v1676
        %v1698 = vsub.f32 %v1597, %v1676
        %v1699 = vsub.f32 %v1602, %v1676
        %v1700 = vsub.f32 %v1605, %v1676
        %v1701 = vsub.f32 %v1610, %v1676
        %v1702 = vsub.f32 %v1613, %v1676
        %v1703 = vsub.f32 %v1618, %v1676
        %v1704 = vsub.f32 %v1621, %v1676
        %v1705 = vsub.f32 %v1626, %v1676
        %v1706 = vsub.f32 %v1629, %v1676
        %v1707 = vsub.f32 %v1634, %v1676
        %v1708 = vsub.f32 %v1637, %v1676
        %v1709 = vmul.f32 %v1677, 1.442695
        %v1710 = vpow.pop %v1709
        %v1711 = vmul.f32 %v1678, 1.442695
        %v1712 = vpow.pop %v1711
        %v1713 = vmul.f32 %v1679, 1.442695
        %v1714 = vpow.pop %v1713
        %v1715 = vmul.f32 %v1680, 1.442695
        %v1716 = vpow.pop %v1715
        %v1717 = vmul.f32 %v1681, 1.442695
        %v1718 = vpow.pop %v1717
        %v1719 = vmul.f32 %v1682, 1.442695
        %v1720 = vpow.pop %v1719
        %v1721 = vmul.f32 %v1683, 1.442695
        %v1722 = vpow.pop %v1721
        %v1723 = vmul.f32 %v1684, 1.442695
        %v1724 = vpow.pop %v1723
        %v1725 = vmul.f32 %v1685, 1.442695
        %v1726 = vpow.pop %v1725
        %v1727 = vmul.f32 %v1686, 1.442695
        %v1728 = vpow.pop %v1727
        %v1729 = vmul.f32 %v1687, 1.442695
        %v1730 = vpow.pop %v1729
        %v1731 = vmul.f32 %v1688, 1.442695
        %v1732 = vpow.pop %v1731
        %v1733 = vmul.f32 %v1689, 1.442695
        %v1734 = vpow.pop %v1733
        %v1735 = vmul.f32 %v1690, 1.442695
        %v1736 = vpow.pop %v1735
        %v1737 = vmul.f32 %v1691, 1.442695
        %v1738 = vpow.pop %v1737
        %v1739 = vmul.f32 %v1692, 1.442695
        %v1740 = vpow.pop %v1739
        %v1741 = vmul.f32 %v1693, 1.442695
        %v1742 = vpow.pop %v1741
        %v1743 = vmul.f32 %v1694, 1.442695
        %v1744 = vpow.pop %v1743
        %v1745 = vmul.f32 %v1695, 1.442695
        %v1746 = vpow.pop %v1745
        %v1747 = vmul.f32 %v1696, 1.442695
        %v1748 = vpow.pop %v1747
        %v1749 = vmul.f32 %v1697, 1.442695
        %v1750 = vpow.pop %v1749
        %v1751 = vmul.f32 %v1698, 1.442695
        %v1752 = vpow.pop %v1751
        %v1753 = vmul.f32 %v1699, 1.442695
        %v1754 = vpow.pop %v1753
        %v1755 = vmul.f32 %v1700, 1.442695
        %v1756 = vpow.pop %v1755
        %v1757 = vmul.f32 %v1701, 1.442695
        %v1758 = vpow.pop %v1757
        %v1759 = vmul.f32 %v1702, 1.442695
        %v1760 = vpow.pop %v1759
        %v1761 = vmul.f32 %v1703, 1.442695
        %v1762 = vpow.pop %v1761
        %v1763 = vmul.f32 %v1704, 1.442695
        %v1764 = vpow.pop %v1763
        %v1765 = vmul.f32 %v1705, 1.442695
        %v1766 = vpow.pop %v1765
        %v1767 = vmul.f32 %v1706, 1.442695
        %v1768 = vpow.pop %v1767
        %v1769 = vmul.f32 %v1707, 1.442695
        %v1770 = vpow.pop %v1769
        %v1771 = vmul.f32 %v1708, 1.442695
        %v1772 = vpow.pop %v1771
        %v1773 = vadd.f32 %v1710, %v1712
        %v1774 = vadd.f32 %v1773, %v1714
        %v1775 = vadd.f32 %v1774, %v1716
        %v1776 = vadd.f32 %v1775, %v1718
        %v1777 = vadd.f32 %v1776, %v1720
        %v1778 = vadd.f32 %v1777, %v1722
        %v1779 = vadd.f32 %v1778, %v1724
        %v1780 = vadd.f32 %v1779, %v1726
        %v1781 = vadd.f32 %v1780, %v1728
        %v1782 = vadd.f32 %v1781, %v1730
        %v1783 = vadd.f32 %v1782, %v1732
        %v1784 = vadd.f32 %v1783, %v1734
        %v1785 = vadd.f32 %v1784, %v1736
        %v1786 = vadd.f32 %v1785, %v1738
        %v1787 = vadd.f32 %v1786, %v1740
        %v1788 = vadd.f32 %v1787, %v1742
        %v1789 = vadd.f32 %v1788, %v1744
        %v1790 = vadd.f32 %v1789, %v1746
        %v1791 = vadd.f32 %v1790, %v1748
        %v1792 = vadd.f32 %v1791, %v1750
        %v1793 = vadd.f32 %v1792, %v1752
        %v1794 = vadd.f32 %v1793, %v1754
        %v1795 = vadd.f32 %v1794, %v1756
        %v1796 = vadd.f32 %v1795, %v1758
        %v1797 = vadd.f32 %v1796, %v1760
        %v1798 = vadd.f32 %v1797, %v1762
        %v1799 = vadd.f32 %v1798, %v1764
        %v1800 = vadd.f32 %v1799, %v1766
        %v1801 = vadd.f32 %v1800, %v1768
        %v1802 = vadd.f32 %v1801, %v1770
        %v1803 = vadd.f32 %v1802, %v1772
        %v1804 = vrot.slane %v1803, 4
        %v1805 = vadd.f32 %v1803, %v1804
        %v1806 = vrot.slane %v1805, 2
        %v1807 = vadd.f32 %v1805, %v1806
        %v1808 = vrot.slane %v1807, 1
        %v1809 = vadd.f32 %v1807, %v1808
        %v1810 = vpack.c.bf16 %v1712, %v1710
        %v1811 = vpack.c.bf16 %v1716, %v1714
        %v1812 = vpack.c.bf16 %v1720, %v1718
        %v1813 = vpack.c.bf16 %v1724, %v1722
        %v1814 = vpack.c.bf16 %v1728, %v1726
        %v1815 = vpack.c.bf16 %v1732, %v1730
        %v1816 = vpack.c.bf16 %v1736, %v1734
        %v1817 = vpack.c.bf16 %v1740, %v1738
        %v1818 = vpack.c.bf16 %v1744, %v1742
        %v1819 = vpack.c.bf16 %v1748, %v1746
        %v1820 = vpack.c.bf16 %v1752, %v1750
        %v1821 = vpack.c.bf16 %v1756, %v1754
        %v1822 = vpack.c.bf16 %v1760, %v1758
        %v1823 = vpack.c.bf16 %v1764, %v1762
        %v1824 = vpack.c.bf16 %v1768, %v1766
        %v1825 = vpack.c.bf16 %v1772, %v1770
        %1826 = vmatprep.subr.bf16.mxu0 0
        %1827 = vmatpush1.bf16.msra.mxu0 %v1810
        %1828 = vmatprep.subr.bf16.mxu0 0
        %1829 = vmatpush1.bf16.msra.mxu0 %v1811
        %1830 = vmatprep.subr.bf16.mxu0 0
        %1831 = vmatpush1.bf16.msra.mxu0 %v1812
        %1832 = vmatprep.subr.bf16.mxu0 0
        %1833 = vmatpush1.bf16.msra.mxu0 %v1813
        %1834 = vmatprep.subr.bf16.mxu0 0
        %1835 = vmatpush1.bf16.msra.mxu0 %v1814
        %1836 = vmatprep.subr.bf16.mxu0 0
        %1837 = vmatpush1.bf16.msra.mxu0 %v1815
        %1838 = vmatprep.subr.bf16.mxu0 0
        %1839 = vmatpush1.bf16.msra.mxu0 %v1816
        %1840 = vmatprep.subr.bf16.mxu0 0
        %1841 = vmatpush1.bf16.msra.mxu0 %v1817
        %1842 = vmatprep.subr.bf16.mxu0 0
        %1843 = vmatpush1.bf16.msra.mxu0 %v1818
        %1844 = vmatprep.subr.bf16.mxu0 0
        %1845 = vmatpush1.bf16.msra.mxu0 %v1819
        %1846 = vmatprep.subr.bf16.mxu0 0
        %1847 = vmatpush1.bf16.msra.mxu0 %v1820
        %1848 = vmatprep.subr.bf16.mxu0 0
        %1849 = vmatpush1.bf16.msra.mxu0 %v1821
        %1850 = vmatprep.subr.bf16.mxu0 0
        %1851 = vmatpush1.bf16.msra.mxu0 %v1822
        %1852 = vmatprep.subr.bf16.mxu0 0
        %1853 = vmatpush1.bf16.msra.mxu0 %v1823
        %1854 = vmatprep.subr.bf16.mxu0 0
        %1855 = vmatpush1.bf16.msra.mxu0 %v1824
        %1856 = vmatprep.subr.bf16.mxu0 0
        %1857 = vmatpush1.bf16.msra.mxu0 %v1825
        %1858 = vmatprep.mubr.bf16.mxu0 %v1396
        %1859 = vmatmul.mubr.bf16.gmra.mrb[0].mxu0 %v1395
        %v1860 = vpop.f32.mrb[0].mxu0
        %v1861 = vadd.f32 0.0, %v1860
        %v1862 = vpop.f32.mrb[0].mxu0
        %v1863 = vpop.f32.mrb[0].mxu0
        %v1864 = vadd.f32 0.0, %v1863
        %v1865 = vpop.f32.mrb[0].mxu0
        %1866 = vmatprep.mubr.bf16.mxu0 %v1398
        %1867 = vmatmul.mubr.bf16.gmra.mrb[0].mxu0 %v1397
        %v1868 = vpop.f32.mrb[0].mxu0
        %v1869 = vadd.f32 0.0, %v1868
        %v1870 = vpop.f32.mrb[0].mxu0
        %v1871 = vpop.f32.mrb[0].mxu0
        %v1872 = vadd.f32 0.0, %v1871
        %v1873 = vpop.f32.mrb[0].mxu0
        %1874 = vdwg.mxu0
        %v1875 = vrcp.pop %v1809
        %v1876 = vmul.f32 %v1861, %v1875
        %v1877 = vmul.f32 %v1864, %v1875
        %v1878 = vmul.f32 %v1869, %v1875
        %v1879 = vmul.f32 %v1872, %v1875
        %v1880 = vpack.c.bf16 %v1877, %v1876
        %v1881 = vpack.c.bf16 %v1879, %v1878
        %v1882 = vld [vmem:[#allocation2 + $0x40] sm:$0xff]
        %v1883 = vld [vmem:[#allocation2 + $0x48] sm:$0xff]
        %v1884 = vld [vmem:[#allocation2 + $0x50] sm:$0xff]
        %v1885 = vld [vmem:[#allocation2 + $0x58] sm:$0xff]
        %v1886 = vld [vmem:[#allocation2 + $0xc0] sm:$0xff]
        %v1887 = vld [vmem:[#allocation2 + $0xc8] sm:$0xff]
        %v1888 = vld [vmem:[#allocation2 + $0xd0] sm:$0xff]
        %v1889 = vld [vmem:[#allocation2 + $0xd8] sm:$0xff]
        %1890 = vxpose.xlu0.c.b16.start [1/8] %v1882, 128
        %1891 = vxpose.xlu0.c.b16.cont [2/8] %v1884, 128
        %1892 = vxpose.xlu0.c.b16.cont [3/8] 0, 128
        %1893 = vxpose.xlu0.c.b16.cont [4/8] 0, 128
        %1894 = vxpose.xlu0.c.b16.cont [5/8] 0, 128
        %1895 = vxpose.xlu0.c.b16.cont [6/8] 0, 128
        %1896 = vxpose.xlu0.c.b16.cont [7/8] 0, 128
        %1897 = vxpose.xlu0.c.b16.end [8/8] 0, 128
        %v1898 = vpop.trf.xlu0
        %v1899 = vpop.trf.xlu0
        %v1900 = vpop.trf.xlu0
        %v1901 = vpop.trf.xlu0
        %v1902 = vpop.trf.xlu0
        %v1903 = vpop.trf.xlu0
        %v1904 = vpop.trf.xlu0
        %v1905 = vpop.trf.xlu0
        %1906 = vxpose.xlu0.c.b16.start [1/8] %v1883, 128
        %1907 = vxpose.xlu0.c.b16.cont [2/8] %v1885, 128
        %1908 = vxpose.xlu0.c.b16.cont [3/8] 0, 128
        %1909 = vxpose.xlu0.c.b16.cont [4/8] 0, 128
        %1910 = vxpose.xlu0.c.b16.cont [5/8] 0, 128
        %1911 = vxpose.xlu0.c.b16.cont [6/8] 0, 128
        %1912 = vxpose.xlu0.c.b16.cont [7/8] 0, 128
        %1913 = vxpose.xlu0.c.b16.end [8/8] 0, 128
        %v1914 = vpop.trf.xlu0
        %v1915 = vpop.trf.xlu0
        %v1916 = vpop.trf.xlu0
        %v1917 = vpop.trf.xlu0
        %v1918 = vpop.trf.xlu0
        %v1919 = vpop.trf.xlu0
        %v1920 = vpop.trf.xlu0
        %v1921 = vpop.trf.xlu0
        %v1923 = vsel %vm939, %v1898, 0
        %v1926 = vsel %vm939, %v1899, 0
        %v1929 = vsel %vm939, %v1900, 0
        %v1932 = vsel %vm939, %v1901, 0
        %v1935 = vsel %vm939, %v1902, 0
        %v1938 = vsel %vm939, %v1903, 0
        %v1941 = vsel %vm939, %v1904, 0
        %v1944 = vsel %vm939, %v1905, 0
        %v1947 = vsel %vm939, %v1914, 0
        %v1950 = vsel %vm939, %v1915, 0
        %v1953 = vsel %vm939, %v1916, 0
        %v1956 = vsel %vm939, %v1917, 0
        %v1959 = vsel %vm939, %v1918, 0
        %v1962 = vsel %vm939, %v1919, 0
        %v1965 = vsel %vm939, %v1920, 0
        %v1968 = vsel %vm939, %v1921, 0
        %1970 = vmatprep.subr.bf16.mxu0 0
        %1971 = vmatpush1.bf16.msra.mxu0 %v895
        %1972 = vmatprep.subr.bf16.mxu0 0
        %1973 = vmatpush1.bf16.msra.mxu0 %v896
        %1974 = vmatprep.subr.bf16.mxu0 0
        %1975 = vmatpush1.bf16.msra.mxu0 0
        %1976 = vmatprep.subr.bf16.mxu0 0
        %1977 = vmatpush1.bf16.msra.mxu0 0
        %1978 = vmatprep.subr.bf16.mxu0 0
        %1979 = vmatpush1.bf16.msra.mxu0 0
        %1980 = vmatprep.subr.bf16.mxu0 0
        %1981 = vmatpush1.bf16.msra.mxu0 0
        %1982 = vmatprep.subr.bf16.mxu0 0
        %1983 = vmatpush1.bf16.msra.mxu0 0
        %1984 = vmatprep.subr.bf16.mxu0 0
        %1985 = vmatpush1.bf16.msra.mxu0 0
        %1986 = vmatprep.subr.bf16.mxu0 0
        %1987 = vmatpush1.bf16.msra.mxu0 0
        %1988 = vmatprep.subr.bf16.mxu0 0
        %1989 = vmatpush1.bf16.msra.mxu0 0
        %1990 = vmatprep.subr.bf16.mxu0 0
        %1991 = vmatpush1.bf16.msra.mxu0 0
        %1992 = vmatprep.subr.bf16.mxu0 0
        %1993 = vmatpush1.bf16.msra.mxu0 0
        %1994 = vmatprep.subr.bf16.mxu0 0
        %1995 = vmatpush1.bf16.msra.mxu0 0
        %1996 = vmatprep.subr.bf16.mxu0 0
        %1997 = vmatpush1.bf16.msra.mxu0 0
        %1998 = vmatprep.subr.bf16.mxu0 0
        %1999 = vmatpush1.bf16.msra.mxu0 0
        %2000 = vmatprep.subr.bf16.mxu0 0
        %2001 = vmatpush1.bf16.msra.mxu0 0
        %2002 = vmatprep.mubr.bf16.mxu0 0
        %2003 = vmatmul.mubr.bf16.gmra.mrb[0].mxu0 %v1923
        %v2004 = vpop.f32.mrb[0].mxu0
        %v2005 = vadd.f32 0.0, %v2004
        %v2006 = vpop.f32.mrb[0].mxu0
        %v2007 = vpop.f32.mrb[0].mxu0
        %v2008 = vadd.f32 0.0, %v2007
        %v2009 = vpop.f32.mrb[0].mxu0
        %2010 = vmatprep.mubr.bf16.mxu0 0
        %2011 = vmatmul.mubr.bf16.gmra.mrb[0].mxu0 %v1926
        %v2012 = vpop.f32.mrb[0].mxu0
        %v2013 = vadd.f32 0.0, %v2012
        %v2014 = vpop.f32.mrb[0].mxu0
        %v2015 = vpop.f32.mrb[0].mxu0
        %v2016 = vadd.f32 0.0, %v2015
        %v2017 = vpop.f32.mrb[0].mxu0
        %2018 = vmatprep.mubr.bf16.mxu0 0
        %2019 = vmatmul.mubr.bf16.gmra.mrb[0].mxu0 %v1929
        %v2020 = vpop.f32.mrb[0].mxu0
        %v2021 = vadd.f32 0.0, %v2020
        %v2022 = vpop.f32.mrb[0].mxu0
        %v2023 = vpop.f32.mrb[0].mxu0
        %v2024 = vadd.f32 0.0, %v2023
        %v2025 = vpop.f32.mrb[0].mxu0
        %2026 = vmatprep.mubr.bf16.mxu0 0
        %2027 = vmatmul.mubr.bf16.gmra.mrb[0].mxu0 %v1932
        %v2028 = vpop.f32.mrb[0].mxu0
        %v2029 = vadd.f32 0.0, %v2028
        %v2030 = vpop.f32.mrb[0].mxu0
        %v2031 = vpop.f32.mrb[0].mxu0
        %v2032 = vadd.f32 0.0, %v2031
        %v2033 = vpop.f32.mrb[0].mxu0
        %2034 = vmatprep.mubr.bf16.mxu0 0
        %2035 = vmatmul.mubr.bf16.gmra.mrb[0].mxu0 %v1935
        %v2036 = vpop.f32.mrb[0].mxu0
        %v2037 = vadd.f32 0.0, %v2036
        %v2038 = vpop.f32.mrb[0].mxu0
        %v2039 = vpop.f32.mrb[0].mxu0
        %v2040 = vadd.f32 0.0, %v2039
        %v2041 = vpop.f32.mrb[0].mxu0
        %2042 = vmatprep.mubr.bf16.mxu0 0
        %2043 = vmatmul.mubr.bf16.gmra.mrb[0].mxu0 %v1938
        %v2044 = vpop.f32.mrb[0].mxu0
        %v2045 = vadd.f32 0.0, %v2044
        %v2046 = vpop.f32.mrb[0].mxu0
        %v2047 = vpop.f32.mrb[0].mxu0
        %v2048 = vadd.f32 0.0, %v2047
        %v2049 = vpop.f32.mrb[0].mxu0
        %2050 = vmatprep.mubr.bf16.mxu0 0
        %2051 = vmatmul.mubr.bf16.gmra.mrb[0].mxu0 %v1941
        %v2052 = vpop.f32.mrb[0].mxu0
        %v2053 = vadd.f32 0.0, %v2052
        %v2054 = vpop.f32.mrb[0].mxu0
        %v2055 = vpop.f32.mrb[0].mxu0
        %v2056 = vadd.f32 0.0, %v2055
        %v2057 = vpop.f32.mrb[0].mxu0
        %2058 = vmatprep.mubr.bf16.mxu0 0
        %2059 = vmatmul.mubr.bf16.gmra.mrb[0].mxu0 %v1944
        %v2060 = vpop.f32.mrb[0].mxu0
        %v2061 = vadd.f32 0.0, %v2060
        %v2062 = vpop.f32.mrb[0].mxu0
        %v2063 = vpop.f32.mrb[0].mxu0
        %v2064 = vadd.f32 0.0, %v2063
        %v2065 = vpop.f32.mrb[0].mxu0
        %2066 = vmatprep.mubr.bf16.mxu0 0
        %2067 = vmatmul.mubr.bf16.gmra.mrb[0].mxu0 %v1947
        %v2068 = vpop.f32.mrb[0].mxu0
        %v2069 = vadd.f32 0.0, %v2068
        %v2070 = vpop.f32.mrb[0].mxu0
        %v2071 = vpop.f32.mrb[0].mxu0
        %v2072 = vadd.f32 0.0, %v2071
        %v2073 = vpop.f32.mrb[0].mxu0
        %2074 = vmatprep.mubr.bf16.mxu0 0
        %2075 = vmatmul.mubr.bf16.gmra.mrb[0].mxu0 %v1950
        %v2076 = vpop.f32.mrb[0].mxu0
        %v2077 = vadd.f32 0.0, %v2076
        %v2078 = vpop.f32.mrb[0].mxu0
        %v2079 = vpop.f32.mrb[0].mxu0
        %v2080 = vadd.f32 0.0, %v2079
        %v2081 = vpop.f32.mrb[0].mxu0
        %2082 = vmatprep.mubr.bf16.mxu0 0
        %2083 = vmatmul.mubr.bf16.gmra.mrb[0].mxu0 %v1953
        %v2084 = vpop.f32.mrb[0].mxu0
        %v2085 = vadd.f32 0.0, %v2084
        %v2086 = vpop.f32.mrb[0].mxu0
        %v2087 = vpop.f32.mrb[0].mxu0
        %v2088 = vadd.f32 0.0, %v2087
        %v2089 = vpop.f32.mrb[0].mxu0
        %2090 = vmatprep.mubr.bf16.mxu0 0
        %2091 = vmatmul.mubr.bf16.gmra.mrb[0].mxu0 %v1956
        %v2092 = vpop.f32.mrb[0].mxu0
        %v2093 = vadd.f32 0.0, %v2092
        %v2094 = vpop.f32.mrb[0].mxu0
        %v2095 = vpop.f32.mrb[0].mxu0
        %v2096 = vadd.f32 0.0, %v2095
        %v2097 = vpop.f32.mrb[0].mxu0
        %2098 = vmatprep.mubr.bf16.mxu0 0
        %2099 = vmatmul.mubr.bf16.gmra.mrb[0].mxu0 %v1959
        %v2100 = vpop.f32.mrb[0].mxu0
        %v2101 = vadd.f32 0.0, %v2100
        %v2102 = vpop.f32.mrb[0].mxu0
        %v2103 = vpop.f32.mrb[0].mxu0
        %v2104 = vadd.f32 0.0, %v2103
        %v2105 = vpop.f32.mrb[0].mxu0
        %2106 = vmatprep.mubr.bf16.mxu0 0
        %2107 = vmatmul.mubr.bf16.gmra.mrb[0].mxu0 %v1962
        %v2108 = vpop.f32.mrb[0].mxu0
        %v2109 = vadd.f32 0.0, %v2108
        %v2110 = vpop.f32.mrb[0].mxu0
        %v2111 = vpop.f32.mrb[0].mxu0
        %v2112 = vadd.f32 0.0, %v2111
        %v2113 = vpop.f32.mrb[0].mxu0
        %2114 = vmatprep.mubr.bf16.mxu0 0
        %2115 = vmatmul.mubr.bf16.gmra.mrb[0].mxu0 %v1965
        %v2116 = vpop.f32.mrb[0].mxu0
        %v2117 = vadd.f32 0.0, %v2116
        %v2118 = vpop.f32.mrb[0].mxu0
        %v2119 = vpop.f32.mrb[0].mxu0
        %v2120 = vadd.f32 0.0, %v2119
        %v2121 = vpop.f32.mrb[0].mxu0
        %2122 = vmatprep.mubr.bf16.mxu0 0
        %2123 = vmatmul.mubr.bf16.gmra.mrb[0].mxu0 %v1968
        %v2124 = vpop.f32.mrb[0].mxu0
        %v2125 = vadd.f32 0.0, %v2124
        %v2126 = vpop.f32.mrb[0].mxu0
        %v2127 = vpop.f32.mrb[0].mxu0
        %v2128 = vadd.f32 0.0, %v2127
        %v2129 = vpop.f32.mrb[0].mxu0
        %2130 = vdwg.mxu0
        %v2131 = vmax.f32 %v2005, %v2021
        %v2132 = vmax.f32 %v2008, %v2024
        %v2133 = vmax.f32 %v2013, %v2029
        %v2134 = vmax.f32 %v2016, %v2032
        %v2135 = vmax.f32 %v2131, %v2037
        %v2136 = vmax.f32 %v2132, %v2040
        %v2137 = vmax.f32 %v2133, %v2045
        %v2138 = vmax.f32 %v2134, %v2048
        %v2139 = vmax.f32 %v2135, %v2053
        %v2140 = vmax.f32 %v2136, %v2056
        %v2141 = vmax.f32 %v2137, %v2061
        %v2142 = vmax.f32 %v2138, %v2064
        %v2143 = vmax.f32 %v2139, %v2069
        %v2144 = vmax.f32 %v2140, %v2072
        %v2145 = vmax.f32 %v2141, %v2077
        %v2146 = vmax.f32 %v2142, %v2080
        %v2147 = vmax.f32 %v2143, %v2085
        %v2148 = vmax.f32 %v2144, %v2088
        %v2149 = vmax.f32 %v2145, %v2093
        %v2150 = vmax.f32 %v2146, %v2096
        %v2151 = vmax.f32 %v2147, %v2101
        %v2152 = vmax.f32 %v2148, %v2104
        %v2153 = vmax.f32 %v2149, %v2109
        %v2154 = vmax.f32 %v2150, %v2112
        %v2155 = vmax.f32 %v2151, %v2117
        %v2156 = vmax.f32 %v2152, %v2120
        %v2157 = vmax.f32 %v2153, %v2125
        %v2158 = vmax.f32 %v2154, %v2128
        %v2159 = vmax.f32 %v2155, %v2156
        %v2160 = vmax.f32 %v2157, %v2158
        %v2161 = vmax.f32 %v2159, %v2160
        %v2162 = vrot.slane %v2161, 4
        %v2163 = vmax.f32 %v2161, %v2162
        %v2164 = vrot.slane %v2163, 2
        %v2165 = vmax.f32 %v2163, %v2164
        %v2166 = vrot.slane %v2165, 1
        %v2167 = vmax.f32 %v2165, %v2166
        %v2168 = vsub.f32 %v2005, %v2167
        %v2169 = vsub.f32 %v2008, %v2167
        %v2170 = vsub.f32 %v2013, %v2167
        %v2171 = vsub.f32 %v2016, %v2167
        %v2172 = vsub.f32 %v2021, %v2167
        %v2173 = vsub.f32 %v2024, %v2167
        %v2174 = vsub.f32 %v2029, %v2167
        %v2175 = vsub.f32 %v2032, %v2167
        %v2176 = vsub.f32 %v2037, %v2167
        %v2177 = vsub.f32 %v2040, %v2167
        %v2178 = vsub.f32 %v2045, %v2167
        %v2179 = vsub.f32 %v2048, %v2167
        %v2180 = vsub.f32 %v2053, %v2167
        %v2181 = vsub.f32 %v2056, %v2167
        %v2182 = vsub.f32 %v2061, %v2167
        %v2183 = vsub.f32 %v2064, %v2167
        %v2184 = vsub.f32 %v2069, %v2167
        %v2185 = vsub.f32 %v2072, %v2167
        %v2186 = vsub.f32 %v2077, %v2167
        %v2187 = vsub.f32 %v2080, %v2167
        %v2188 = vsub.f32 %v2085, %v2167
        %v2189 = vsub.f32 %v2088, %v2167
        %v2190 = vsub.f32 %v2093, %v2167
        %v2191 = vsub.f32 %v2096, %v2167
        %v2192 = vsub.f32 %v2101, %v2167
        %v2193 = vsub.f32 %v2104, %v2167
        %v2194 = vsub.f32 %v2109, %v2167
        %v2195 = vsub.f32 %v2112, %v2167
        %v2196 = vsub.f32 %v2117, %v2167
        %v2197 = vsub.f32 %v2120, %v2167
        %v2198 = vsub.f32 %v2125, %v2167
        %v2199 = vsub.f32 %v2128, %v2167
        %v2200 = vmul.f32 %v2168, 1.442695
        %v2201 = vpow.pop %v2200
        %v2202 = vmul.f32 %v2169, 1.442695
        %v2203 = vpow.pop %v2202
        %v2204 = vmul.f32 %v2170, 1.442695
        %v2205 = vpow.pop %v2204
        %v2206 = vmul.f32 %v2171, 1.442695
        %v2207 = vpow.pop %v2206
        %v2208 = vmul.f32 %v2172, 1.442695
        %v2209 = vpow.pop %v2208
        %v2210 = vmul.f32 %v2173, 1.442695
        %v2211 = vpow.pop %v2210
        %v2212 = vmul.f32 %v2174, 1.442695
        %v2213 = vpow.pop %v2212
        %v2214 = vmul.f32 %v2175, 1.442695
        %v2215 = vpow.pop %v2214
        %v2216 = vmul.f32 %v2176, 1.442695
        %v2217 = vpow.pop %v2216
        %v2218 = vmul.f32 %v2177, 1.442695
        %v2219 = vpow.pop %v2218
        %v2220 = vmul.f32 %v2178, 1.442695
        %v2221 = vpow.pop %v2220
        %v2222 = vmul.f32 %v2179, 1.442695
        %v2223 = vpow.pop %v2222
        %v2224 = vmul.f32 %v2180, 1.442695
        %v2225 = vpow.pop %v2224
        %v2226 = vmul.f32 %v2181, 1.442695
        %v2227 = vpow.pop %v2226
        %v2228 = vmul.f32 %v2182, 1.442695
        %v2229 = vpow.pop %v2228
        %v2230 = vmul.f32 %v2183, 1.442695
        %v2231 = vpow.pop %v2230
        %v2232 = vmul.f32 %v2184, 1.442695
        %v2233 = vpow.pop %v2232
        %v2234 = vmul.f32 %v2185, 1.442695
        %v2235 = vpow.pop %v2234
        %v2236 = vmul.f32 %v2186, 1.442695
        %v2237 = vpow.pop %v2236
        %v2238 = vmul.f32 %v2187, 1.442695
        %v2239 = vpow.pop %v2238
        %v2240 = vmul.f32 %v2188, 1.442695
        %v2241 = vpow.pop %v2240
        %v2242 = vmul.f32 %v2189, 1.442695
        %v2243 = vpow.pop %v2242
        %v2244 = vmul.f32 %v2190, 1.442695
        %v2245 = vpow.pop %v2244
        %v2246 = vmul.f32 %v2191, 1.442695
        %v2247 = vpow.pop %v2246
        %v2248 = vmul.f32 %v2192, 1.442695
        %v2249 = vpow.pop %v2248
        %v2250 = vmul.f32 %v2193, 1.442695
        %v2251 = vpow.pop %v2250
        %v2252 = vmul.f32 %v2194, 1.442695
        %v2253 = vpow.pop %v2252
        %v2254 = vmul.f32 %v2195, 1.442695
        %v2255 = vpow.pop %v2254
        %v2256 = vmul.f32 %v2196, 1.442695
        %v2257 = vpow.pop %v2256
        %v2258 = vmul.f32 %v2197, 1.442695
        %v2259 = vpow.pop %v2258
        %v2260 = vmul.f32 %v2198, 1.442695
        %v2261 = vpow.pop %v2260
        %v2262 = vmul.f32 %v2199, 1.442695
        %v2263 = vpow.pop %v2262
        %v2264 = vadd.f32 %v2201, %v2203
        %v2265 = vadd.f32 %v2264, %v2205
        %v2266 = vadd.f32 %v2265, %v2207
        %v2267 = vadd.f32 %v2266, %v2209
        %v2268 = vadd.f32 %v2267, %v2211
        %v2269 = vadd.f32 %v2268, %v2213
        %v2270 = vadd.f32 %v2269, %v2215
        %v2271 = vadd.f32 %v2270, %v2217
        %v2272 = vadd.f32 %v2271, %v2219
        %v2273 = vadd.f32 %v2272, %v2221
        %v2274 = vadd.f32 %v2273, %v2223
        %v2275 = vadd.f32 %v2274, %v2225
        %v2276 = vadd.f32 %v2275, %v2227
        %v2277 = vadd.f32 %v2276, %v2229
        %v2278 = vadd.f32 %v2277, %v2231
        %v2279 = vadd.f32 %v2278, %v2233
        %v2280 = vadd.f32 %v2279, %v2235
        %v2281 = vadd.f32 %v2280, %v2237
        %v2282 = vadd.f32 %v2281, %v2239
        %v2283 = vadd.f32 %v2282, %v2241
        %v2284 = vadd.f32 %v2283, %v2243
        %v2285 = vadd.f32 %v2284, %v2245
        %v2286 = vadd.f32 %v2285, %v2247
        %v2287 = vadd.f32 %v2286, %v2249
        %v2288 = vadd.f32 %v2287, %v2251
        %v2289 = vadd.f32 %v2288, %v2253
        %v2290 = vadd.f32 %v2289, %v2255
        %v2291 = vadd.f32 %v2290, %v2257
        %v2292 = vadd.f32 %v2291, %v2259
        %v2293 = vadd.f32 %v2292, %v2261
        %v2294 = vadd.f32 %v2293, %v2263
        %v2295 = vrot.slane %v2294, 4
        %v2296 = vadd.f32 %v2294, %v2295
        %v2297 = vrot.slane %v2296, 2
        %v2298 = vadd.f32 %v2296, %v2297
        %v2299 = vrot.slane %v2298, 1
        %v2300 = vadd.f32 %v2298, %v2299
        %v2301 = vpack.c.bf16 %v2203, %v2201
        %v2302 = vpack.c.bf16 %v2207, %v2205
        %v2303 = vpack.c.bf16 %v2211, %v2209
        %v2304 = vpack.c.bf16 %v2215, %v2213
        %v2305 = vpack.c.bf16 %v2219, %v2217
        %v2306 = vpack.c.bf16 %v2223, %v2221
        %v2307 = vpack.c.bf16 %v2227, %v2225
        %v2308 = vpack.c.bf16 %v2231, %v2229
        %v2309 = vpack.c.bf16 %v2235, %v2233
        %v2310 = vpack.c.bf16 %v2239, %v2237
        %v2311 = vpack.c.bf16 %v2243, %v2241
        %v2312 = vpack.c.bf16 %v2247, %v2245
        %v2313 = vpack.c.bf16 %v2251, %v2249
        %v2314 = vpack.c.bf16 %v2255, %v2253
        %v2315 = vpack.c.bf16 %v2259, %v2257
        %v2316 = vpack.c.bf16 %v2263, %v2261
        %2317 = vmatprep.subr.bf16.mxu0 0
        %2318 = vmatpush1.bf16.msra.mxu0 %v2301
        %2319 = vmatprep.subr.bf16.mxu0 0
        %2320 = vmatpush1.bf16.msra.mxu0 %v2302
        %2321 = vmatprep.subr.bf16.mxu0 0
        %2322 = vmatpush1.bf16.msra.mxu0 %v2303
        %2323 = vmatprep.subr.bf16.mxu0 0
        %2324 = vmatpush1.bf16.msra.mxu0 %v2304
        %2325 = vmatprep.subr.bf16.mxu0 0
        %2326 = vmatpush1.bf16.msra.mxu0 %v2305
        %2327 = vmatprep.subr.bf16.mxu0 0
        %2328 = vmatpush1.bf16.msra.mxu0 %v2306
        %2329 = vmatprep.subr.bf16.mxu0 0
        %2330 = vmatpush1.bf16.msra.mxu0 %v2307
        %2331 = vmatprep.subr.bf16.mxu0 0
        %2332 = vmatpush1.bf16.msra.mxu0 %v2308
        %2333 = vmatprep.subr.bf16.mxu0 0
        %2334 = vmatpush1.bf16.msra.mxu0 %v2309
        %2335 = vmatprep.subr.bf16.mxu0 0
        %2336 = vmatpush1.bf16.msra.mxu0 %v2310
        %2337 = vmatprep.subr.bf16.mxu0 0
        %2338 = vmatpush1.bf16.msra.mxu0 %v2311
        %2339 = vmatprep.subr.bf16.mxu0 0
        %2340 = vmatpush1.bf16.msra.mxu0 %v2312
        %2341 = vmatprep.subr.bf16.mxu0 0
        %2342 = vmatpush1.bf16.msra.mxu0 %v2313
        %2343 = vmatprep.subr.bf16.mxu0 0
        %2344 = vmatpush1.bf16.msra.mxu0 %v2314
        %2345 = vmatprep.subr.bf16.mxu0 0
        %2346 = vmatpush1.bf16.msra.mxu0 %v2315
        %2347 = vmatprep.subr.bf16.mxu0 0
        %2348 = vmatpush1.bf16.msra.mxu0 %v2316
        %2349 = vmatprep.mubr.bf16.mxu0 %v1887
        %2350 = vmatmul.mubr.bf16.gmra.mrb[0].mxu0 %v1886
        %v2351 = vpop.f32.mrb[0].mxu0
        %v2352 = vadd.f32 0.0, %v2351
        %v2353 = vpop.f32.mrb[0].mxu0
        %v2354 = vpop.f32.mrb[0].mxu0
        %v2355 = vadd.f32 0.0, %v2354
        %v2356 = vpop.f32.mrb[0].mxu0
        %2357 = vmatprep.mubr.bf16.mxu0 %v1889
        %2358 = vmatmul.mubr.bf16.gmra.mrb[0].mxu0 %v1888
        %v2359 = vpop.f32.mrb[0].mxu0
        %v2360 = vadd.f32 0.0, %v2359
        %v2361 = vpop.f32.mrb[0].mxu0
        %v2362 = vpop.f32.mrb[0].mxu0
        %v2363 = vadd.f32 0.0, %v2362
        %v2364 = vpop.f32.mrb[0].mxu0
        %2365 = vdwg.mxu0
        %v2366 = vrcp.pop %v2300
        %v2367 = vmul.f32 %v2352, %v2366
        %v2368 = vmul.f32 %v2355, %v2366
        %v2369 = vmul.f32 %v2360, %v2366
        %v2370 = vmul.f32 %v2363, %v2366
        %v2371 = vpack.c.bf16 %v2368, %v2367
        %v2372 = vpack.c.bf16 %v2370, %v2369
        %v2373 = vld [vmem:[#allocation2 + $0x60] sm:$0xff]
        %v2374 = vld [vmem:[#allocation2 + $0x68] sm:$0xff]
        %v2375 = vld [vmem:[#allocation2 + $0x70] sm:$0xff]
        %v2376 = vld [vmem:[#allocation2 + $0x78] sm:$0xff]
        %v2377 = vld [vmem:[#allocation2 + $0xe0] sm:$0xff]
        %v2378 = vld [vmem:[#allocation2 + $0xe8] sm:$0xff]
        %v2379 = vld [vmem:[#allocation2 + $0xf0] sm:$0xff]
        %v2380 = vld [vmem:[#allocation2 + $0xf8] sm:$0xff]
        %2381 = vxpose.xlu0.c.b16.start [1/8] %v2373, 128
        %2382 = vxpose.xlu0.c.b16.cont [2/8] %v2375, 128
        %2383 = vxpose.xlu0.c.b16.cont [3/8] 0, 128
        %2384 = vxpose.xlu0.c.b16.cont [4/8] 0, 128
        %2385 = vxpose.xlu0.c.b16.cont [5/8] 0, 128
        %2386 = vxpose.xlu0.c.b16.cont [6/8] 0, 128
        %2387 = vxpose.xlu0.c.b16.cont [7/8] 0, 128
        %2388 = vxpose.xlu0.c.b16.end [8/8] 0, 128
        %v2389 = vpop.trf.xlu0
        %v2390 = vpop.trf.xlu0
        %v2391 = vpop.trf.xlu0
        %v2392 = vpop.trf.xlu0
        %v2393 = vpop.trf.xlu0
        %v2394 = vpop.trf.xlu0
        %v2395 = vpop.trf.xlu0
        %v2396 = vpop.trf.xlu0
        %2397 = vxpose.xlu0.c.b16.start [1/8] %v2374, 128
        %2398 = vxpose.xlu0.c.b16.cont [2/8] %v2376, 128
        %2399 = vxpose.xlu0.c.b16.cont [3/8] 0, 128
        %2400 = vxpose.xlu0.c.b16.cont [4/8] 0, 128
        %2401 = vxpose.xlu0.c.b16.cont [5/8] 0, 128
        %2402 = vxpose.xlu0.c.b16.cont [6/8] 0, 128
        %2403 = vxpose.xlu0.c.b16.cont [7/8] 0, 128
        %2404 = vxpose.xlu0.c.b16.end [8/8] 0, 128
        %v2405 = vpop.trf.xlu0
        %v2406 = vpop.trf.xlu0
        %v2407 = vpop.trf.xlu0
        %v2408 = vpop.trf.xlu0
        %v2409 = vpop.trf.xlu0
        %v2410 = vpop.trf.xlu0
        %v2411 = vpop.trf.xlu0
        %v2412 = vpop.trf.xlu0
        %v2414 = vsel %vm939, %v2389, 0
        %v2417 = vsel %vm939, %v2390, 0
        %v2420 = vsel %vm939, %v2391, 0
        %v2423 = vsel %vm939, %v2392, 0
        %v2426 = vsel %vm939, %v2393, 0
        %v2429 = vsel %vm939, %v2394, 0
        %v2432 = vsel %vm939, %v2395, 0
        %v2435 = vsel %vm939, %v2396, 0
        %v2438 = vsel %vm939, %v2405, 0
        %v2441 = vsel %vm939, %v2406, 0
        %v2444 = vsel %vm939, %v2407, 0
        %v2447 = vsel %vm939, %v2408, 0
        %v2450 = vsel %vm939, %v2409, 0
        %v2453 = vsel %vm939, %v2410, 0
        %v2456 = vsel %vm939, %v2411, 0
        %v2459 = vsel %vm939, %v2412, 0
        %2461 = vmatprep.subr.bf16.mxu0 0
        %2462 = vmatpush1.bf16.msra.mxu0 %v897
        %2463 = vmatprep.subr.bf16.mxu0 0
        %2464 = vmatpush1.bf16.msra.mxu0 %v898
        %2465 = vmatprep.subr.bf16.mxu0 0
        %2466 = vmatpush1.bf16.msra.mxu0 0
        %2467 = vmatprep.subr.bf16.mxu0 0
        %2468 = vmatpush1.bf16.msra.mxu0 0
        %2469 = vmatprep.subr.bf16.mxu0 0
        %2470 = vmatpush1.bf16.msra.mxu0 0
        %2471 = vmatprep.subr.bf16.mxu0 0
        %2472 = vmatpush1.bf16.msra.mxu0 0
        %2473 = vmatprep.subr.bf16.mxu0 0
        %2474 = vmatpush1.bf16.msra.mxu0 0
        %2475 = vmatprep.subr.bf16.mxu0 0
        %2476 = vmatpush1.bf16.msra.mxu0 0
        %2477 = vmatprep.subr.bf16.mxu0 0
        %2478 = vmatpush1.bf16.msra.mxu0 0
        %2479 = vmatprep.subr.bf16.mxu0 0
        %2480 = vmatpush1.bf16.msra.mxu0 0
        %2481 = vmatprep.subr.bf16.mxu0 0
        %2482 = vmatpush1.bf16.msra.mxu0 0
        %2483 = vmatprep.subr.bf16.mxu0 0
        %2484 = vmatpush1.bf16.msra.mxu0 0
        %2485 = vmatprep.subr.bf16.mxu0 0
        %2486 = vmatpush1.bf16.msra.mxu0 0
        %2487 = vmatprep.subr.bf16.mxu0 0
        %2488 = vmatpush1.bf16.msra.mxu0 0
        %2489 = vmatprep.subr.bf16.mxu0 0
        %2490 = vmatpush1.bf16.msra.mxu0 0
        %2491 = vmatprep.subr.bf16.mxu0 0
        %2492 = vmatpush1.bf16.msra.mxu0 0
        %2493 = vmatprep.mubr.bf16.mxu0 0
        %2494 = vmatmul.mubr.bf16.gmra.mrb[0].mxu0 %v2414
        %v2495 = vpop.f32.mrb[0].mxu0
        %v2496 = vadd.f32 0.0, %v2495
        %v2497 = vpop.f32.mrb[0].mxu0
        %v2498 = vpop.f32.mrb[0].mxu0
        %v2499 = vadd.f32 0.0, %v2498
        %v2500 = vpop.f32.mrb[0].mxu0
        %2501 = vmatprep.mubr.bf16.mxu0 0
        %2502 = vmatmul.mubr.bf16.gmra.mrb[0].mxu0 %v2417
        %v2503 = vpop.f32.mrb[0].mxu0
        %v2504 = vadd.f32 0.0, %v2503
        %v2505 = vpop.f32.mrb[0].mxu0
        %v2506 = vpop.f32.mrb[0].mxu0
        %v2507 = vadd.f32 0.0, %v2506
        %v2508 = vpop.f32.mrb[0].mxu0
        %2509 = vmatprep.mubr.bf16.mxu0 0
        %2510 = vmatmul.mubr.bf16.gmra.mrb[0].mxu0 %v2420
        %v2511 = vpop.f32.mrb[0].mxu0
        %v2512 = vadd.f32 0.0, %v2511
        %v2513 = vpop.f32.mrb[0].mxu0
        %v2514 = vpop.f32.mrb[0].mxu0
        %v2515 = vadd.f32 0.0, %v2514
        %v2516 = vpop.f32.mrb[0].mxu0
        %2517 = vmatprep.mubr.bf16.mxu0 0
        %2518 = vmatmul.mubr.bf16.gmra.mrb[0].mxu0 %v2423
        %v2519 = vpop.f32.mrb[0].mxu0
        %v2520 = vadd.f32 0.0, %v2519
        %v2521 = vpop.f32.mrb[0].mxu0
        %v2522 = vpop.f32.mrb[0].mxu0
        %v2523 = vadd.f32 0.0, %v2522
        %v2524 = vpop.f32.mrb[0].mxu0
        %2525 = vmatprep.mubr.bf16.mxu0 0
        %2526 = vmatmul.mubr.bf16.gmra.mrb[0].mxu0 %v2426
        %v2527 = vpop.f32.mrb[0].mxu0
        %v2528 = vadd.f32 0.0, %v2527
        %v2529 = vpop.f32.mrb[0].mxu0
        %v2530 = vpop.f32.mrb[0].mxu0
        %v2531 = vadd.f32 0.0, %v2530
        %v2532 = vpop.f32.mrb[0].mxu0
        %2533 = vmatprep.mubr.bf16.mxu0 0
        %2534 = vmatmul.mubr.bf16.gmra.mrb[0].mxu0 %v2429
        %v2535 = vpop.f32.mrb[0].mxu0
        %v2536 = vadd.f32 0.0, %v2535
        %v2537 = vpop.f32.mrb[0].mxu0
        %v2538 = vpop.f32.mrb[0].mxu0
        %v2539 = vadd.f32 0.0, %v2538
        %v2540 = vpop.f32.mrb[0].mxu0
        %2541 = vmatprep.mubr.bf16.mxu0 0
        %2542 = vmatmul.mubr.bf16.gmra.mrb[0].mxu0 %v2432
        %v2543 = vpop.f32.mrb[0].mxu0
        %v2544 = vadd.f32 0.0, %v2543
        %v2545 = vpop.f32.mrb[0].mxu0
        %v2546 = vpop.f32.mrb[0].mxu0
        %v2547 = vadd.f32 0.0, %v2546
        %v2548 = vpop.f32.mrb[0].mxu0
        %2549 = vmatprep.mubr.bf16.mxu0 0
        %2550 = vmatmul.mubr.bf16.gmra.mrb[0].mxu0 %v2435
        %v2551 = vpop.f32.mrb[0].mxu0
        %v2552 = vadd.f32 0.0, %v2551
        %v2553 = vpop.f32.mrb[0].mxu0
        %v2554 = vpop.f32.mrb[0].mxu0
        %v2555 = vadd.f32 0.0, %v2554
        %v2556 = vpop.f32.mrb[0].mxu0
        %2557 = vmatprep.mubr.bf16.mxu0 0
        %2558 = vmatmul.mubr.bf16.gmra.mrb[0].mxu0 %v2438
        %v2559 = vpop.f32.mrb[0].mxu0
        %v2560 = vadd.f32 0.0, %v2559
        %v2561 = vpop.f32.mrb[0].mxu0
        %v2562 = vpop.f32.mrb[0].mxu0
        %v2563 = vadd.f32 0.0, %v2562
        %v2564 = vpop.f32.mrb[0].mxu0
        %2565 = vmatprep.mubr.bf16.mxu0 0
        %2566 = vmatmul.mubr.bf16.gmra.mrb[0].mxu0 %v2441
        %v2567 = vpop.f32.mrb[0].mxu0
        %v2568 = vadd.f32 0.0, %v2567
        %v2569 = vpop.f32.mrb[0].mxu0
        %v2570 = vpop.f32.mrb[0].mxu0
        %v2571 = vadd.f32 0.0, %v2570
        %v2572 = vpop.f32.mrb[0].mxu0
        %2573 = vmatprep.mubr.bf16.mxu0 0
        %2574 = vmatmul.mubr.bf16.gmra.mrb[0].mxu0 %v2444
        %v2575 = vpop.f32.mrb[0].mxu0
        %v2576 = vadd.f32 0.0, %v2575
        %v2577 = vpop.f32.mrb[0].mxu0
        %v2578 = vpop.f32.mrb[0].mxu0
        %v2579 = vadd.f32 0.0, %v2578
        %v2580 = vpop.f32.mrb[0].mxu0
        %2581 = vmatprep.mubr.bf16.mxu0 0
        %2582 = vmatmul.mubr.bf16.gmra.mrb[0].mxu0 %v2447
        %v2583 = vpop.f32.mrb[0].mxu0
        %v2584 = vadd.f32 0.0, %v2583
        %v2585 = vpop.f32.mrb[0].mxu0
        %v2586 = vpop.f32.mrb[0].mxu0
        %v2587 = vadd.f32 0.0, %v2586
        %v2588 = vpop.f32.mrb[0].mxu0
        %2589 = vmatprep.mubr.bf16.mxu0 0
        %2590 = vmatmul.mubr.bf16.gmra.mrb[0].mxu0 %v2450
        %v2591 = vpop.f32.mrb[0].mxu0
        %v2592 = vadd.f32 0.0, %v2591
        %v2593 = vpop.f32.mrb[0].mxu0
        %v2594 = vpop.f32.mrb[0].mxu0
        %v2595 = vadd.f32 0.0, %v2594
        %v2596 = vpop.f32.mrb[0].mxu0
        %2597 = vmatprep.mubr.bf16.mxu0 0
        %2598 = vmatmul.mubr.bf16.gmra.mrb[0].mxu0 %v2453
        %v2599 = vpop.f32.mrb[0].mxu0
        %v2600 = vadd.f32 0.0, %v2599
        %v2601 = vpop.f32.mrb[0].mxu0
        %v2602 = vpop.f32.mrb[0].mxu0
        %v2603 = vadd.f32 0.0, %v2602
        %v2604 = vpop.f32.mrb[0].mxu0
        %2605 = vmatprep.mubr.bf16.mxu0 0
        %2606 = vmatmul.mubr.bf16.gmra.mrb[0].mxu0 %v2456
        %v2607 = vpop.f32.mrb[0].mxu0
        %v2608 = vadd.f32 0.0, %v2607
        %v2609 = vpop.f32.mrb[0].mxu0
        %v2610 = vpop.f32.mrb[0].mxu0
        %v2611 = vadd.f32 0.0, %v2610
        %v2612 = vpop.f32.mrb[0].mxu0
        %2613 = vmatprep.mubr.bf16.mxu0 0
        %2614 = vmatmul.mubr.bf16.gmra.mrb[0].mxu0 %v2459
        %v2615 = vpop.f32.mrb[0].mxu0
        %v2616 = vadd.f32 0.0, %v2615
        %v2617 = vpop.f32.mrb[0].mxu0
        %v2618 = vpop.f32.mrb[0].mxu0
        %v2619 = vadd.f32 0.0, %v2618
        %v2620 = vpop.f32.mrb[0].mxu0
        %2621 = vdwg.mxu0
        %v2622 = vmax.f32 %v2496, %v2512
        %v2623 = vmax.f32 %v2499, %v2515
        %v2624 = vmax.f32 %v2504, %v2520
        %v2625 = vmax.f32 %v2507, %v2523
        %v2626 = vmax.f32 %v2622, %v2528
        %v2627 = vmax.f32 %v2623, %v2531
        %v2628 = vmax.f32 %v2624, %v2536
        %v2629 = vmax.f32 %v2625, %v2539
        %v2630 = vmax.f32 %v2626, %v2544
        %v2631 = vmax.f32 %v2627, %v2547
        %v2632 = vmax.f32 %v2628, %v2552
        %v2633 = vmax.f32 %v2629, %v2555
        %v2634 = vmax.f32 %v2630, %v2560
        %v2635 = vmax.f32 %v2631, %v2563
        %v2636 = vmax.f32 %v2632, %v2568
        %v2637 = vmax.f32 %v2633, %v2571
        %v2638 = vmax.f32 %v2634, %v2576
        %v2639 = vmax.f32 %v2635, %v2579
        %v2640 = vmax.f32 %v2636, %v2584
        %v2641 = vmax.f32 %v2637, %v2587
        %v2642 = vmax.f32 %v2638, %v2592
        %v2643 = vmax.f32 %v2639, %v2595
        %v2644 = vmax.f32 %v2640, %v2600
        %v2645 = vmax.f32 %v2641, %v2603
        %v2646 = vmax.f32 %v2642, %v2608
        %v2647 = vmax.f32 %v2643, %v2611
        %v2648 = vmax.f32 %v2644, %v2616
        %v2649 = vmax.f32 %v2645, %v2619
        %v2650 = vmax.f32 %v2646, %v2647
        %v2651 = vmax.f32 %v2648, %v2649
        %v2652 = vmax.f32 %v2650, %v2651
        %v2653 = vrot.slane %v2652, 4
        %v2654 = vmax.f32 %v2652, %v2653
        %v2655 = vrot.slane %v2654, 2
        %v2656 = vmax.f32 %v2654, %v2655
        %v2657 = vrot.slane %v2656, 1
        %v2658 = vmax.f32 %v2656, %v2657
        %v2659 = vsub.f32 %v2496, %v2658
        %v2660 = vsub.f32 %v2499, %v2658
        %v2661 = vsub.f32 %v2504, %v2658
        %v2662 = vsub.f32 %v2507, %v2658
        %v2663 = vsub.f32 %v2512, %v2658
        %v2664 = vsub.f32 %v2515, %v2658
        %v2665 = vsub.f32 %v2520, %v2658
        %v2666 = vsub.f32 %v2523, %v2658
        %v2667 = vsub.f32 %v2528, %v2658
        %v2668 = vsub.f32 %v2531, %v2658
        %v2669 = vsub.f32 %v2536, %v2658
        %v2670 = vsub.f32 %v2539, %v2658
        %v2671 = vsub.f32 %v2544, %v2658
        %v2672 = vsub.f32 %v2547, %v2658
        %v2673 = vsub.f32 %v2552, %v2658
        %v2674 = vsub.f32 %v2555, %v2658
        %v2675 = vsub.f32 %v2560, %v2658
        %v2676 = vsub.f32 %v2563, %v2658
        %v2677 = vsub.f32 %v2568, %v2658
        %v2678 = vsub.f32 %v2571, %v2658
        %v2679 = vsub.f32 %v2576, %v2658
        %v2680 = vsub.f32 %v2579, %v2658
        %v2681 = vsub.f32 %v2584, %v2658
        %v2682 = vsub.f32 %v2587, %v2658
        %v2683 = vsub.f32 %v2592, %v2658
        %v2684 = vsub.f32 %v2595, %v2658
        %v2685 = vsub.f32 %v2600, %v2658
        %v2686 = vsub.f32 %v2603, %v2658
        %v2687 = vsub.f32 %v2608, %v2658
        %v2688 = vsub.f32 %v2611, %v2658
        %v2689 = vsub.f32 %v2616, %v2658
        %v2690 = vsub.f32 %v2619, %v2658
        %v2691 = vmul.f32 %v2659, 1.442695
        %v2692 = vpow.pop %v2691
        %v2693 = vmul.f32 %v2660, 1.442695
        %v2694 = vpow.pop %v2693
        %v2695 = vmul.f32 %v2661, 1.442695
        %v2696 = vpow.pop %v2695
        %v2697 = vmul.f32 %v2662, 1.442695
        %v2698 = vpow.pop %v2697
        %v2699 = vmul.f32 %v2663, 1.442695
        %v2700 = vpow.pop %v2699
        %v2701 = vmul.f32 %v2664, 1.442695
        %v2702 = vpow.pop %v2701
        %v2703 = vmul.f32 %v2665, 1.442695
        %v2704 = vpow.pop %v2703
        %v2705 = vmul.f32 %v2666, 1.442695
        %v2706 = vpow.pop %v2705
        %v2707 = vmul.f32 %v2667, 1.442695
        %v2708 = vpow.pop %v2707
        %v2709 = vmul.f32 %v2668, 1.442695
        %v2710 = vpow.pop %v2709
        %v2711 = vmul.f32 %v2669, 1.442695
        %v2712 = vpow.pop %v2711
        %v2713 = vmul.f32 %v2670, 1.442695
        %v2714 = vpow.pop %v2713
        %v2715 = vmul.f32 %v2671, 1.442695
        %v2716 = vpow.pop %v2715
        %v2717 = vmul.f32 %v2672, 1.442695
        %v2718 = vpow.pop %v2717
        %v2719 = vmul.f32 %v2673, 1.442695
        %v2720 = vpow.pop %v2719
        %v2721 = vmul.f32 %v2674, 1.442695
        %v2722 = vpow.pop %v2721
        %v2723 = vmul.f32 %v2675, 1.442695
        %v2724 = vpow.pop %v2723
        %v2725 = vmul.f32 %v2676, 1.442695
        %v2726 = vpow.pop %v2725
        %v2727 = vmul.f32 %v2677, 1.442695
        %v2728 = vpow.pop %v2727
        %v2729 = vmul.f32 %v2678, 1.442695
        %v2730 = vpow.pop %v2729
        %v2731 = vmul.f32 %v2679, 1.442695
        %v2732 = vpow.pop %v2731
        %v2733 = vmul.f32 %v2680, 1.442695
        %v2734 = vpow.pop %v2733
        %v2735 = vmul.f32 %v2681, 1.442695
        %v2736 = vpow.pop %v2735
        %v2737 = vmul.f32 %v2682, 1.442695
        %v2738 = vpow.pop %v2737
        %v2739 = vmul.f32 %v2683, 1.442695
        %v2740 = vpow.pop %v2739
        %v2741 = vmul.f32 %v2684, 1.442695
        %v2742 = vpow.pop %v2741
        %v2743 = vmul.f32 %v2685, 1.442695
        %v2744 = vpow.pop %v2743
        %v2745 = vmul.f32 %v2686, 1.442695
        %v2746 = vpow.pop %v2745
        %v2747 = vmul.f32 %v2687, 1.442695
        %v2748 = vpow.pop %v2747
        %v2749 = vmul.f32 %v2688, 1.442695
        %v2750 = vpow.pop %v2749
        %v2751 = vmul.f32 %v2689, 1.442695
        %v2752 = vpow.pop %v2751
        %v2753 = vmul.f32 %v2690, 1.442695
        %v2754 = vpow.pop %v2753
        %v2755 = vadd.f32 %v2692, %v2694
        %v2756 = vadd.f32 %v2755, %v2696
        %v2757 = vadd.f32 %v2756, %v2698
        %v2758 = vadd.f32 %v2757, %v2700
        %v2759 = vadd.f32 %v2758, %v2702
        %v2760 = vadd.f32 %v2759, %v2704
        %v2761 = vadd.f32 %v2760, %v2706
        %v2762 = vadd.f32 %v2761, %v2708
        %v2763 = vadd.f32 %v2762, %v2710
        %v2764 = vadd.f32 %v2763, %v2712
        %v2765 = vadd.f32 %v2764, %v2714
        %v2766 = vadd.f32 %v2765, %v2716
        %v2767 = vadd.f32 %v2766, %v2718
        %v2768 = vadd.f32 %v2767, %v2720
        %v2769 = vadd.f32 %v2768, %v2722
        %v2770 = vadd.f32 %v2769, %v2724
        %v2771 = vadd.f32 %v2770, %v2726
        %v2772 = vadd.f32 %v2771, %v2728
        %v2773 = vadd.f32 %v2772, %v2730
        %v2774 = vadd.f32 %v2773, %v2732
        %v2775 = vadd.f32 %v2774, %v2734
        %v2776 = vadd.f32 %v2775, %v2736
        %v2777 = vadd.f32 %v2776, %v2738
        %v2778 = vadd.f32 %v2777, %v2740
        %v2779 = vadd.f32 %v2778, %v2742
        %v2780 = vadd.f32 %v2779, %v2744
        %v2781 = vadd.f32 %v2780, %v2746
        %v2782 = vadd.f32 %v2781, %v2748
        %v2783 = vadd.f32 %v2782, %v2750
        %v2784 = vadd.f32 %v2783, %v2752
        %v2785 = vadd.f32 %v2784, %v2754
        %v2786 = vrot.slane %v2785, 4
        %v2787 = vadd.f32 %v2785, %v2786
        %v2788 = vrot.slane %v2787, 2
        %v2789 = vadd.f32 %v2787, %v2788
        %v2790 = vrot.slane %v2789, 1
        %v2791 = vadd.f32 %v2789, %v2790
        %v2792 = vpack.c.bf16 %v2694, %v2692
        %v2793 = vpack.c.bf16 %v2698, %v2696
        %v2794 = vpack.c.bf16 %v2702, %v2700
        %v2795 = vpack.c.bf16 %v2706, %v2704
        %v2796 = vpack.c.bf16 %v2710, %v2708
        %v2797 = vpack.c.bf16 %v2714, %v2712
        %v2798 = vpack.c.bf16 %v2718, %v2716
        %v2799 = vpack.c.bf16 %v2722, %v2720
        %v2800 = vpack.c.bf16 %v2726, %v2724
        %v2801 = vpack.c.bf16 %v2730, %v2728
        %v2802 = vpack.c.bf16 %v2734, %v2732
        %v2803 = vpack.c.bf16 %v2738, %v2736
        %v2804 = vpack.c.bf16 %v2742, %v2740
        %v2805 = vpack.c.bf16 %v2746, %v2744
        %v2806 = vpack.c.bf16 %v2750, %v2748
        %v2807 = vpack.c.bf16 %v2754, %v2752
        %2808 = vmatprep.subr.bf16.mxu0 0
        %2809 = vmatpush1.bf16.msra.mxu0 %v2792
        %2810 = vmatprep.subr.bf16.mxu0 0
        %2811 = vmatpush1.bf16.msra.mxu0 %v2793
        %2812 = vmatprep.subr.bf16.mxu0 0
        %2813 = vmatpush1.bf16.msra.mxu0 %v2794
        %2814 = vmatprep.subr.bf16.mxu0 0
        %2815 = vmatpush1.bf16.msra.mxu0 %v2795
        %2816 = vmatprep.subr.bf16.mxu0 0
        %2817 = vmatpush1.bf16.msra.mxu0 %v2796
        %2818 = vmatprep.subr.bf16.mxu0 0
        %2819 = vmatpush1.bf16.msra.mxu0 %v2797
        %2820 = vmatprep.subr.bf16.mxu0 0
        %2821 = vmatpush1.bf16.msra.mxu0 %v2798
        %2822 = vmatprep.subr.bf16.mxu0 0
        %2823 = vmatpush1.bf16.msra.mxu0 %v2799
        %2824 = vmatprep.subr.bf16.mxu0 0
        %2825 = vmatpush1.bf16.msra.mxu0 %v2800
        %2826 = vmatprep.subr.bf16.mxu0 0
        %2827 = vmatpush1.bf16.msra.mxu0 %v2801
        %2828 = vmatprep.subr.bf16.mxu0 0
        %2829 = vmatpush1.bf16.msra.mxu0 %v2802
        %2830 = vmatprep.subr.bf16.mxu0 0
        %2831 = vmatpush1.bf16.msra.mxu0 %v2803
        %2832 = vmatprep.subr.bf16.mxu0 0
        %2833 = vmatpush1.bf16.msra.mxu0 %v2804
        %2834 = vmatprep.subr.bf16.mxu0 0
        %2835 = vmatpush1.bf16.msra.mxu0 %v2805
        %2836 = vmatprep.subr.bf16.mxu0 0
        %2837 = vmatpush1.bf16.msra.mxu0 %v2806
        %2838 = vmatprep.subr.bf16.mxu0 0
        %2839 = vmatpush1.bf16.msra.mxu0 %v2807
        %2840 = vmatprep.mubr.bf16.mxu0 %v2378
        %2841 = vmatmul.mubr.bf16.gmra.mrb[0].mxu0 %v2377
        %v2842 = vpop.f32.mrb[0].mxu0
        %v2843 = vadd.f32 0.0, %v2842
        %v2844 = vpop.f32.mrb[0].mxu0
        %v2845 = vpop.f32.mrb[0].mxu0
        %v2846 = vadd.f32 0.0, %v2845
        %v2847 = vpop.f32.mrb[0].mxu0
        %2848 = vmatprep.mubr.bf16.mxu0 %v2380
        %2849 = vmatmul.mubr.bf16.gmra.mrb[0].mxu0 %v2379
        %v2850 = vpop.f32.mrb[0].mxu0
        %v2851 = vadd.f32 0.0, %v2850
        %v2852 = vpop.f32.mrb[0].mxu0
        %v2853 = vpop.f32.mrb[0].mxu0
        %v2854 = vadd.f32 0.0, %v2853
        %v2855 = vpop.f32.mrb[0].mxu0
        %2856 = vdwg.mxu0
        %v2857 = vrcp.pop %v2791
        %v2858 = vmul.f32 %v2843, %v2857
        %v2859 = vmul.f32 %v2846, %v2857
        %v2860 = vmul.f32 %v2851, %v2857
        %v2861 = vmul.f32 %v2854, %v2857
        %v2862 = vpack.c.bf16 %v2859, %v2858
        %v2863 = vpack.c.bf16 %v2861, %v2860
        %v2864 = vld [vmem:[%s3] sm:$0xf]
        %v2865 = vld [vmem:[%s3 + $0x4] sm:$0xf]
        %v2866 = vld [vmem:[%s3 + $0x8] sm:$0xf]
        %v2867 = vld [vmem:[%s3 + $0xc] sm:$0xf]
        %v2868 = vld [vmem:[%s3 + $0x10] sm:$0xf]
        %v2869 = vld [vmem:[%s3 + $0x14] sm:$0xf]
        %v2870 = vld [vmem:[%s3 + $0x18] sm:$0xf]
        %v2871 = vld [vmem:[%s3 + $0x1c] sm:$0xf]
        %v2872 = vld [vmem:[%s3 + $0x20] sm:$0xf]
        %v2873 = vld [vmem:[%s3 + $0x24] sm:$0xf]
        %v2874 = vld [vmem:[%s3 + $0x28] sm:$0xf]
        %v2875 = vld [vmem:[%s3 + $0x2c] sm:$0xf]
        %v2876 = vld [vmem:[%s3 + $0x30] sm:$0xf]
        %v2877 = vld [vmem:[%s3 + $0x34] sm:$0xf]
        %v2878 = vld [vmem:[%s3 + $0x38] sm:$0xf]
        %v2879 = vld [vmem:[%s3 + $0x3c] sm:$0xf]
        %v2880 = vld [vmem:[%s4] sm:$0xf]
        %2882 = vset.pattern.permute.xlu0 0
        %2883 = vperm.xlu0 %2882, %v2880
        %v2884 = vpop.permute.xlu0 %2883
        %v2902 = vunpack.c.l.b16 %v2864
        %v2903 = vunpack.c.l.b16 %v2865
        %v2904 = vunpack.c.l.b16 %v2866
        %v2905 = vunpack.c.l.b16 %v2867
        %v2906 = vunpack.c.l.b16 %v2868
        %v2907 = vunpack.c.l.b16 %v2869
        %v2908 = vunpack.c.l.b16 %v2870
        %v2909 = vunpack.c.l.b16 %v2871
        %v2910 = vunpack.c.l.b16 %v2872
        %v2911 = vunpack.c.l.b16 %v2873
        %v2912 = vunpack.c.l.b16 %v2874
        %v2913 = vunpack.c.l.b16 %v2875
        %v2914 = vunpack.c.l.b16 %v2876
        %v2915 = vunpack.c.l.b16 %v2877
        %v2916 = vunpack.c.l.b16 %v2878
        %v2917 = vunpack.c.l.b16 %v2879
        %v2918 = vpack.c.b16 %v2903, %v2902
        %v2919 = vpack.c.b16 %v2905, %v2904
        %v2920 = vpack.c.b16 %v2907, %v2906
        %v2921 = vpack.c.b16 %v2909, %v2908
        %v2922 = vpack.c.b16 %v2911, %v2910
        %v2923 = vpack.c.b16 %v2913, %v2912
        %v2924 = vpack.c.b16 %v2915, %v2914
        %v2925 = vpack.c.b16 %v2917, %v2916
        %2934 = vxpose.xlu0.c.b16.start [1/8] %v2918, 128
        %2935 = vxpose.xlu0.c.b16.cont [2/8] %v2919, 128
        %2936 = vxpose.xlu0.c.b16.cont [3/8] %v2920, 128
        %2937 = vxpose.xlu0.c.b16.cont [4/8] %v2921, 128
        %2938 = vxpose.xlu0.c.b16.cont [5/8] %v2922, 128
        %2939 = vxpose.xlu0.c.b16.cont [6/8] %v2923, 128
        %2940 = vxpose.xlu0.c.b16.cont [7/8] %v2924, 128
        %2941 = vxpose.xlu0.c.b16.end [8/8] %v2925, 128
        %v2942 = vpop.trf.xlu0
        %v2943 = vpop.trf.xlu0
        %v2944 = vpop.trf.xlu0
        %v2945 = vpop.trf.xlu0
        %v2946 = vpop.trf.xlu0
        %v2947 = vpop.trf.xlu0
        %v2948 = vpop.trf.xlu0
        %v2949 = vpop.trf.xlu0
        %2950 = vmatprep.subr.bf16.mxu0 0
        %2951 = vmatpush1.bf16.msra.mxu0 %v1389
        %2952 = vmatprep.subr.bf16.mxu0 0
        %2953 = vmatpush1.bf16.msra.mxu0 %v1390
        %2954 = vmatprep.subr.bf16.mxu0 0
        %2955 = vmatpush1.bf16.msra.mxu0 %v1880
        %2956 = vmatprep.subr.bf16.mxu0 0
        %2957 = vmatpush1.bf16.msra.mxu0 %v1881
        %2958 = vmatprep.subr.bf16.mxu0 0
        %2959 = vmatpush1.bf16.msra.mxu0 %v2371
        %2960 = vmatprep.subr.bf16.mxu0 0
        %2961 = vmatpush1.bf16.msra.mxu0 %v2372
        %2962 = vmatprep.subr.bf16.mxu0 0
        %2963 = vmatpush1.bf16.msra.mxu0 %v2862
        %2964 = vmatprep.subr.bf16.mxu0 0
        %2965 = vmatpush1.bf16.msra.mxu0 %v2863
        %2966 = vmatprep.subr.bf16.mxu0 0
        %2967 = vmatpush1.bf16.msra.mxu0 0
        %2968 = vmatprep.subr.bf16.mxu0 0
        %2969 = vmatpush1.bf16.msra.mxu0 0
        %2970 = vmatprep.subr.bf16.mxu0 0
        %2971 = vmatpush1.bf16.msra.mxu0 0
        %2972 = vmatprep.subr.bf16.mxu0 0
        %2973 = vmatpush1.bf16.msra.mxu0 0
        %2974 = vmatprep.subr.bf16.mxu0 0
        %2975 = vmatpush1.bf16.msra.mxu0 0
        %2976 = vmatprep.subr.bf16.mxu0 0
        %2977 = vmatpush1.bf16.msra.mxu0 0
        %2978 = vmatprep.subr.bf16.mxu0 0
        %2979 = vmatpush1.bf16.msra.mxu0 0
        %2980 = vmatprep.subr.bf16.mxu0 0
        %2981 = vmatpush1.bf16.msra.mxu0 0
        %2982 = vmatprep.mubr.bf16.mxu0 0
        %2983 = vmatmul.mubr.bf16.gmra.mrb[0].mxu0 %v2942
        %v2984 = vpop.f32.mrb[0].mxu0
        %v2985 = vadd.f32 %v2884, %v2984
        %v2986 = vpop.f32.mrb[0].mxu0
        %v2987 = vpop.f32.mrb[0].mxu0
        %v2988 = vpop.f32.mrb[0].mxu0
        %2989 = vdwg.mxu0
        %2990 = vst [vmem:[%s254] sm:$0xf] %v2985
        %s2991 = sand.u32 %s158, 1
        %s2992 = scalar_lea.sflag [#allocation4], %s2991
        %s2993 = sand.u32 %s158, 1
        %s2994 = smul.addr %s2993, 4
        %s2995 = scalar_lea.vmem [#allocation3], %s2994
        // Predicated region
        $region45: #{tpu_custom_call.1} parent=39 // pred_check
          %p2996 = pneg %p168
        $region46: #{tpu_custom_call.1} parent=39 // pred_check_branch
          %2998 = sbr.rel (%p2996) target = $region48
        $region47: #{tpu_custom_call.1} parent=39 // pred_region
          %s3000 = ssub.s32 64, 64
          %3001 = vsyncadd %s2992, %s3000
          %s3002 = smul.addr %s23, 2
          %s3003 = sadd.s32 %s24, %s3002
          %s3004 = smul.addr %s3003, 64
          %s3005 = scalar_lea.hbm %s5, %s3004
          %s3007 = sshll.u32 %s2995, 4
          %s3008 = int_to_ptr.vmem [resolvable:$true] %s3007
          %3010 = dma.vmem_to_hbm [thread:$0]  %s3008, 64, %s3005, %s2992
        $region48: #{tpu_custom_call.1} parent=39 // pred_fallthru
          _
      $region40: #{tpu_custom_call.1} parent=5 // pred_fallthru
        _
      %p3011 = scmp.le.s32.totalorder 2, %s14
      // Predicated region
      $region49: #{tpu_custom_call.1} parent=5 // pred_check
        %p3012 = pneg %p3011
      $region50: #{tpu_custom_call.1} parent=5 // pred_check_branch
        %3014 = sbr.rel (%p3012) target = $region52
      $region51: #{tpu_custom_call.1} parent=5 // pred_region
        %s3015 = ssub.s32 %s14, 2
        // Predicated region
        $region53: #{tpu_custom_call.1} parent=51 // pred_check
          %p3016 = pneg %p174
        $region54: #{tpu_custom_call.1} parent=51 // pred_check_branch
          %3018 = sbr.rel (%p3016) target = $region56
        $region55: #{tpu_custom_call.1} parent=51 // pred_region
          %s3019 = sand.u32 %s159, 1
          %s3020 = scalar_lea.sflag [#allocation4], %s3019
          %s3021 = sand.u32 %s159, 1
          %s3022 = smul.addr %s3021, 4
          %s3023 = scalar_lea.vmem [#allocation3], %s3022
          %3024 = dma.done %s3020, 64
        $region56: #{tpu_custom_call.1} parent=51 // pred_fallthru
          _
      $region52: #{tpu_custom_call.1} parent=5 // pred_fallthru
        _
    $region6: #{tpu_custom_call.1} parent=1 // loop_footer
      %s18 = sadd.s32 1, %s14
    $region7: #{tpu_custom_call.1} parent=1 // loop_footer_branch
      %13 = sbr.rel target = $region3
    $region8: #{tpu_custom_call.1} parent=1 // loop_exit
      _
    %3025 = vsyncpa [#allocation4], 1
    %s3026 = scalar_lea.sflag [#allocation4], 1
    %3027 = vsyncpa %s3026, 1

</llo_original>
